<compile_context>
chip_gen: v5e
topology: v5e:2x2
jax: 0.10.0
libtpu: 0.0.40
codegen_flags: <defaults>
</compile_context>

<pallas_src>
import jax
import jax.numpy as jnp
from jax.experimental import pallas as pl
from jax.experimental.pallas import tpu as pltpu

HIDDEN = 512
BN_EPS = 1e-5


def _contrastive_kernel(x_ref,
                        w1_ref, g1_ref, beta1_ref,
                        w2_ref, g2_ref, beta2_ref,
                        w3_ref, b3_ref,
                        o_ref):
    # ---- layer 1: Linear (bias cancelled by BN) -> BN(batch stats) -> ReLU ----
    x = x_ref[...]
    h = jnp.dot(x.astype(jnp.bfloat16), w1_ref[...],
                preferred_element_type=jnp.float32)
    mu = jnp.mean(h, axis=0, keepdims=True)
    var = jnp.maximum(jnp.mean(h * h, axis=0, keepdims=True) - mu * mu, 0.0)
    scale = g1_ref[...] * jax.lax.rsqrt(var + BN_EPS)       # (1, 512)
    shift = beta1_ref[...] - mu * scale                     # (1, 512)
    h = jnp.maximum(h * scale + shift, 0.0)

    # ---- layer 2: Linear (bias cancelled by BN) -> BN(batch stats) -> ReLU ----
    h = jnp.dot(h.astype(jnp.bfloat16), w2_ref[...],
                preferred_element_type=jnp.float32)
    mu = jnp.mean(h, axis=0, keepdims=True)
    var = jnp.maximum(jnp.mean(h * h, axis=0, keepdims=True) - mu * mu, 0.0)
    scale = g2_ref[...] * jax.lax.rsqrt(var + BN_EPS)
    shift = beta2_ref[...] - mu * scale
    h = jnp.maximum(h * scale + shift, 0.0)

    # ---- layer 3: Linear (lane-padded to 128 output columns) ------------------
    z = jnp.dot(h.astype(jnp.bfloat16), w3_ref[...],
                preferred_element_type=jnp.float32) + b3_ref[...]

    # ---- L2 normalize along features (padded columns are exactly zero) --------
    # Matches torch.linalg.norm division (no eps), like the original module.
    inv_norm = jax.lax.rsqrt(jnp.sum(z * z, axis=1, keepdims=True))
    o_ref[...] = (z * inv_norm).astype(o_ref.dtype)


def contrastive_net(x, params):
    """x: (B, input_dim) float32. Returns (B, output_dim) float32, unit L2 rows."""
    B = x.shape[0]
    out_dim = params["w3"].shape[1]
    out_pad = ((out_dim + 127) // 128) * 128   # lane-dense output width

    # bf16 weights: halves weight DMA, MXU is bf16-native on v5e/v6e/v7x.
    w1 = params["w1"].astype(jnp.bfloat16)
    w2 = params["w2"].astype(jnp.bfloat16)
    w3 = jnp.zeros((params["w3"].shape[0], out_pad), jnp.float32)
    w3 = w3.at[:, :out_dim].set(params["w3"]).astype(jnp.bfloat16)
    b3 = jnp.zeros((1, out_pad), jnp.float32).at[:, :out_dim].set(params["b3"])

    # Whole problem fits comfortably in VMEM -> single grid point, full-array
    # blocks (required anyway: BN batch stats couple all rows of the batch).
    out = pl.pallas_call(
        _contrastive_kernel,
        out_shape=jax.ShapeDtypeStruct((B, out_pad), jnp.float32),
        in_specs=[pl.BlockSpec(memory_space=pltpu.VMEM)] * 9,
        out_specs=pl.BlockSpec(memory_space=pltpu.VMEM),
    )(x, w1, params["g1"], params["be1"],
      w2, params["g2"], params["be2"],
      w3, b3)
    return out[:, :out_dim]
    # TODO(synk): for large batches, tile B over a grid with resident weights
    # (constant weight index_map) and a two-pass BN-stats design; mark the
    # batch axis "parallel" to use both v7x TensorCores.


def init_params(key, input_dim, output_dim):
    """Deterministic synthetic parameters matching the module's shapes.

    Linear weights stored as (in, out); biases / BN params stored as (1, F).
    b1/b2 exist only for the pure-JAX reference (the kernel omits them since
    BatchNorm's mean subtraction cancels them exactly).
    """
    ks = jax.random.split(key, 6)

    def lin(k, fan_in, fan_out):
        bound = 1.0 / jnp.sqrt(fan_in)
        kw, kb = jax.random.split(k)
        w = jax.random.uniform(kw, (fan_in, fan_out), jnp.float32, -bound, bound)
        b = jax.random.uniform(kb, (1, fan_out), jnp.float32, -bound, bound)
        return w, b

    w1, b1 = lin(ks[0], input_dim, HIDDEN)
    w2, b2 = lin(ks[1], HIDDEN, HIDDEN)
    w3, b3 = lin(ks[2], HIDDEN, output_dim)
    g1 = 1.0 + 0.01 * jax.random.normal(ks[3], (1, HIDDEN), jnp.float32)
    be1 = 0.01 * jax.random.normal(ks[4], (1, HIDDEN), jnp.float32)
    g2 = 1.0 + 0.01 * jax.random.normal(ks[5], (1, HIDDEN), jnp.float32)
    be2 = jnp.zeros((1, HIDDEN), jnp.float32)
    return dict(w1=w1, b1=b1, g1=g1, be1=be1,
                w2=w2, b2=b2, g2=g2, be2=be2,
                w3=w3, b3=b3)


def reference_forward(x, p):
    """Pure-JAX f32 reference mirroring the PyTorch module (with biases)."""
    h = x @ p["w1"] + p["b1"]
    mu = h.mean(0, keepdims=True); var = ((h - mu) ** 2).mean(0, keepdims=True)
    h = jnp.maximum((h - mu) / jnp.sqrt(var + BN_EPS) * p["g1"] + p["be1"], 0.0)
    h = h @ p["w2"] + p["b2"]
    mu = h.mean(0, keepdims=True); var = ((h - mu) ** 2).mean(0, keepdims=True)
    h = jnp.maximum((h - mu) / jnp.sqrt(var + BN_EPS) * p["g2"] + p["be2"], 0.0)
    z = h @ p["w3"] + p["b3"]
    return z / jnp.linalg.norm(z, axis=1, keepdims=True)


if __name__ == "__main__":
    key = jax.random.PRNGKey(0)
    k_x, k_p = jax.random.split(key)

    B, input_dim, output_dim = 8, 32, 16     # small shapes consistent with the module
    x = jax.random.normal(k_x, (B, input_dim), jnp.float32)
    params = init_params(k_p, input_dim, output_dim)

    out = contrastive_net(x, params)
    out = jax.block_until_ready(out)

    ref = reference_forward(x, params)
    assert out.shape == (B, output_dim)
    # Tolerance is relaxed vs the f32 reference because the kernel runs the
    # matmuls with bf16 operands (f32 accumulation) on the MXU.
    assert jnp.allclose(out, ref, atol=2.5e-2, rtol=2.5e-2), "mismatch vs reference"
    # Outputs must be unit L2 rows.
    assert jnp.allclose(jnp.linalg.norm(out, axis=1), 1.0, atol=1e-4)

    print("KERNEL_OK")
</pallas_src>

<mosaic_0001>
module attributes {stable_mosaic.version = 11 : i64} {
  func.func @_contrastive_kernel(%arg0: memref<8x32xf32, #tpu.memory_space<vmem>>, %arg1: memref<32x512xbf16, #tpu.memory_space<vmem>>, %arg2: memref<1x512xf32, #tpu.memory_space<vmem>>, %arg3: memref<1x512xf32, #tpu.memory_space<vmem>>, %arg4: memref<512x512xbf16, #tpu.memory_space<vmem>>, %arg5: memref<1x512xf32, #tpu.memory_space<vmem>>, %arg6: memref<1x512xf32, #tpu.memory_space<vmem>>, %arg7: memref<512x128xbf16, #tpu.memory_space<vmem>>, %arg8: memref<1x128xf32, #tpu.memory_space<vmem>>, %arg9: memref<8x128xf32, #tpu.memory_space<vmem>>) attributes {dimension_semantics = [], scalar_prefetch = 0 : i64, scratch_operands = 0 : i64, tpu.core_type = #tpu.core_type<tc>} {
    %c0 = arith.constant 0 : index
    %c0_0 = arith.constant 0 : index
    %0 = vector.load %arg0[%c0, %c0_0] : memref<8x32xf32, #tpu.memory_space<vmem>>, vector<8x32xf32>
    %1 = arith.truncf %0 : vector<8x32xf32> to vector<8x32xbf16>
    %c0_1 = arith.constant 0 : index
    %c0_2 = arith.constant 0 : index
    %2 = vector.load %arg1[%c0_1, %c0_2] : memref<32x512xbf16, #tpu.memory_space<vmem>>, vector<32x512xbf16>
    %cst = arith.constant dense<0.000000e+00> : vector<8x512xf32>
    %3 = tpu.matmul %1, %2, %cst {dimension_numbers = #tpu.dot_dimension_numbers<[1], [0], [0], [1], [0, 0, 1, 1], [], []>} : vector<8x32xbf16>, vector<32x512xbf16>, vector<8x512xf32> -> vector<8x512xf32>
    %cst_3 = arith.constant dense<0.000000e+00> : vector<512xf32>
    %4 = vector.multi_reduction <add>, %3, %cst_3 [0] : vector<8x512xf32> to vector<512xf32>
    %5 = vector.shape_cast %4 : vector<512xf32> to vector<1x512xf32>
    %cst_4 = arith.constant 8.000000e+00 : f32
    %6 = vector.broadcast %cst_4 : f32 to vector<1x512xf32>
    %7 = arith.divf %5, %6 : vector<1x512xf32>
    %8 = arith.mulf %3, %3 : vector<8x512xf32>
    %cst_5 = arith.constant dense<0.000000e+00> : vector<512xf32>
    %9 = vector.multi_reduction <add>, %8, %cst_5 [0] : vector<8x512xf32> to vector<512xf32>
    %10 = vector.shape_cast %9 : vector<512xf32> to vector<1x512xf32>
    %cst_6 = arith.constant 8.000000e+00 : f32
    %11 = vector.broadcast %cst_6 : f32 to vector<1x512xf32>
    %12 = arith.divf %10, %11 : vector<1x512xf32>
    %13 = arith.mulf %7, %7 : vector<1x512xf32>
    %14 = arith.subf %12, %13 : vector<1x512xf32>
    %cst_7 = arith.constant 0.000000e+00 : f32
    %15 = vector.broadcast %cst_7 : f32 to vector<1x512xf32>
    %16 = arith.maximumf %14, %15 : vector<1x512xf32>
    %c0_8 = arith.constant 0 : index
    %c0_9 = arith.constant 0 : index
    %17 = vector.load %arg2[%c0_8, %c0_9] : memref<1x512xf32, #tpu.memory_space<vmem>>, vector<1x512xf32>
    %cst_10 = arith.constant 9.99999974E-6 : f32
    %18 = vector.broadcast %cst_10 : f32 to vector<1x512xf32>
    %19 = arith.addf %16, %18 : vector<1x512xf32>
    %20 = math.rsqrt %19 : vector<1x512xf32>
    %21 = arith.mulf %17, %20 : vector<1x512xf32>
    %c0_11 = arith.constant 0 : index
    %c0_12 = arith.constant 0 : index
    %22 = vector.load %arg3[%c0_11, %c0_12] : memref<1x512xf32, #tpu.memory_space<vmem>>, vector<1x512xf32>
    %23 = arith.mulf %7, %21 : vector<1x512xf32>
    %24 = arith.subf %22, %23 : vector<1x512xf32>
    %25 = vector.broadcast %21 : vector<1x512xf32> to vector<8x512xf32>
    %26 = arith.mulf %3, %25 : vector<8x512xf32>
    %27 = vector.broadcast %24 : vector<1x512xf32> to vector<8x512xf32>
    %28 = arith.addf %26, %27 : vector<8x512xf32>
    %cst_13 = arith.constant 0.000000e+00 : f32
    %29 = vector.broadcast %cst_13 : f32 to vector<8x512xf32>
    %30 = arith.maximumf %28, %29 : vector<8x512xf32>
    %31 = arith.truncf %30 : vector<8x512xf32> to vector<8x512xbf16>
    %c0_14 = arith.constant 0 : index
    %c0_15 = arith.constant 0 : index
    %32 = vector.load %arg4[%c0_14, %c0_15] : memref<512x512xbf16, #tpu.memory_space<vmem>>, vector<512x512xbf16>
    %cst_16 = arith.constant dense<0.000000e+00> : vector<8x512xf32>
    %33 = tpu.matmul %31, %32, %cst_16 {dimension_numbers = #tpu.dot_dimension_numbers<[1], [0], [0], [1], [0, 0, 1, 1], [], []>} : vector<8x512xbf16>, vector<512x512xbf16>, vector<8x512xf32> -> vector<8x512xf32>
    %cst_17 = arith.constant dense<0.000000e+00> : vector<512xf32>
    %34 = vector.multi_reduction <add>, %33, %cst_17 [0] : vector<8x512xf32> to vector<512xf32>
    %35 = vector.shape_cast %34 : vector<512xf32> to vector<1x512xf32>
    %cst_18 = arith.constant 8.000000e+00 : f32
    %36 = vector.broadcast %cst_18 : f32 to vector<1x512xf32>
    %37 = arith.divf %35, %36 : vector<1x512xf32>
    %38 = arith.mulf %33, %33 : vector<8x512xf32>
    %cst_19 = arith.constant dense<0.000000e+00> : vector<512xf32>
    %39 = vector.multi_reduction <add>, %38, %cst_19 [0] : vector<8x512xf32> to vector<512xf32>
    %40 = vector.shape_cast %39 : vector<512xf32> to vector<1x512xf32>
    %cst_20 = arith.constant 8.000000e+00 : f32
    %41 = vector.broadcast %cst_20 : f32 to vector<1x512xf32>
    %42 = arith.divf %40, %41 : vector<1x512xf32>
    %43 = arith.mulf %37, %37 : vector<1x512xf32>
    %44 = arith.subf %42, %43 : vector<1x512xf32>
    %cst_21 = arith.constant 0.000000e+00 : f32
    %45 = vector.broadcast %cst_21 : f32 to vector<1x512xf32>
    %46 = arith.maximumf %44, %45 : vector<1x512xf32>
    %c0_22 = arith.constant 0 : index
    %c0_23 = arith.constant 0 : index
    %47 = vector.load %arg5[%c0_22, %c0_23] : memref<1x512xf32, #tpu.memory_space<vmem>>, vector<1x512xf32>
    %cst_24 = arith.constant 9.99999974E-6 : f32
    %48 = vector.broadcast %cst_24 : f32 to vector<1x512xf32>
    %49 = arith.addf %46, %48 : vector<1x512xf32>
    %50 = math.rsqrt %49 : vector<1x512xf32>
    %51 = arith.mulf %47, %50 : vector<1x512xf32>
    %c0_25 = arith.constant 0 : index
    %c0_26 = arith.constant 0 : index
    %52 = vector.load %arg6[%c0_25, %c0_26] : memref<1x512xf32, #tpu.memory_space<vmem>>, vector<1x512xf32>
    %53 = arith.mulf %37, %51 : vector<1x512xf32>
    %54 = arith.subf %52, %53 : vector<1x512xf32>
    %55 = vector.broadcast %51 : vector<1x512xf32> to vector<8x512xf32>
    %56 = arith.mulf %33, %55 : vector<8x512xf32>
    %57 = vector.broadcast %54 : vector<1x512xf32> to vector<8x512xf32>
    %58 = arith.addf %56, %57 : vector<8x512xf32>
    %cst_27 = arith.constant 0.000000e+00 : f32
    %59 = vector.broadcast %cst_27 : f32 to vector<8x512xf32>
    %60 = arith.maximumf %58, %59 : vector<8x512xf32>
    %61 = arith.truncf %60 : vector<8x512xf32> to vector<8x512xbf16>
    %c0_28 = arith.constant 0 : index
    %c0_29 = arith.constant 0 : index
    %62 = vector.load %arg7[%c0_28, %c0_29] : memref<512x128xbf16, #tpu.memory_space<vmem>>, vector<512x128xbf16>
    %cst_30 = arith.constant dense<0.000000e+00> : vector<8x128xf32>
    %63 = tpu.matmul %61, %62, %cst_30 {dimension_numbers = #tpu.dot_dimension_numbers<[1], [0], [0], [1], [0, 0, 1, 1], [], []>} : vector<8x512xbf16>, vector<512x128xbf16>, vector<8x128xf32> -> vector<8x128xf32>
    %c0_31 = arith.constant 0 : index
    %c0_32 = arith.constant 0 : index
    %64 = vector.load %arg8[%c0_31, %c0_32] : memref<1x128xf32, #tpu.memory_space<vmem>>, vector<1x128xf32>
    %65 = vector.broadcast %64 : vector<1x128xf32> to vector<8x128xf32>
    %66 = arith.addf %63, %65 : vector<8x128xf32>
    %67 = arith.mulf %66, %66 : vector<8x128xf32>
    %cst_33 = arith.constant dense<0.000000e+00> : vector<8xf32>
    %68 = vector.multi_reduction <add>, %67, %cst_33 [1] : vector<8x128xf32> to vector<8xf32>
    %69 = vector.shape_cast %68 : vector<8xf32> to vector<8x1xf32>
    %70 = math.rsqrt %69 : vector<8x1xf32>
    %71 = vector.broadcast %70 : vector<8x1xf32> to vector<8x128xf32>
    %72 = arith.mulf %66, %71 : vector<8x128xf32>
    %c0_34 = arith.constant 0 : index
    %c0_35 = arith.constant 0 : index
    %73 = vector.load %arg9[%c0_34, %c0_35] : memref<8x128xf32, #tpu.memory_space<vmem>>, vector<8x128xf32>
    tpu.vector_store %arg9[%c0_34, %c0_35], %72 {strides = array<i32>} : memref<8x128xf32, #tpu.memory_space<vmem>>, vector<8x128xf32>,
    return
  }
}

</mosaic_0001>

<llo_original>
// kernel: tpu_custom_call.1
$region0: #{tpu_custom_call.1}
  #allocation0 [shape = 'u32[]', space=smem, size = 0x4, offset = 0x4, fixed_abs, tag = 'smem constant byte address 0x4 - core index']
  #allocation1 [shape = 'u32[72,128]{1,0:T(1,128)}', space=vmem, size = 0x9000, scoped, tag = 'internal scratch']
  %s0 = inlined_call_operand.hbm [shape: f32[8,32], index: 0, kind: input, shape index: {}]
  %s1 = inlined_call_operand.hbm [shape: bf16[32,512], index: 1, kind: input, shape index: {}]
  %s2 = inlined_call_operand.hbm [shape: f32[1,512], index: 2, kind: input, shape index: {}]
  %s3 = inlined_call_operand.hbm [shape: f32[1,512], index: 3, kind: input, shape index: {}]
  %s4 = inlined_call_operand.hbm [shape: bf16[512,512], index: 4, kind: input, shape index: {}]
  %s5 = inlined_call_operand.vmem [shape: f32[1,512], index: 5, kind: input, shape index: {}]
  %s6 = inlined_call_operand.hbm [shape: f32[1,512], index: 6, kind: input, shape index: {}]
  %s7 = inlined_call_operand.hbm [shape: bf16[512,128], index: 7, kind: input, shape index: {}]
  %s8 = inlined_call_operand.vmem [shape: f32[1,128], index: 8, kind: input, shape index: {}]
  %s9 = inlined_call_operand.hbm [shape: f32[8,128], index: 9, kind: output, shape index: {}]
  %s10 = sld [smem:[#allocation0]]
  $region74: #{tpu_custom_call.1} parent=0
    _
  %s12 = ssub.s32 1, %s10
  %s13 = scalar_select 0, %s12, %s10
  $region1: #{tpu_custom_call.1} parent=0
    #allocation2 [shape = 'u8[4096]{0}', space=vmem, size = 0x1000, scoped, tag = 'input window, operand 0, single buffered']
    #allocation3 [shape = 's32[1]{0}', space=sflag, size = 0x4, scoped, tag = 'scoped memory for tpu_custom_call.1']
    #allocation4 [shape = 's32[1]{0}', space=sflag, size = 0x4, scoped, tag = 'scoped memory for tpu_custom_call.1']
    #allocation5 [shape = 'u8[32768]{0}', space=vmem, size = 0x8000, scoped, tag = 'input window, operand 1, single buffered']
    #allocation6 [shape = 's32[1]{0}', space=sflag, size = 0x4, scoped, tag = 'scoped memory for tpu_custom_call.1']
    #allocation7 [shape = 'u8[2048]{0}', space=vmem, size = 0x800, scoped, tag = 'input window, operand 2, single buffered']
    #allocation8 [shape = 'u8[2048]{0}', space=vmem, size = 0x800, scoped, tag = 'input window, operand 3, single buffered']
    #allocation9 [shape = 's32[1]{0}', space=sflag, size = 0x4, scoped, tag = 'scoped memory for tpu_custom_call.1']
    #allocation10 [shape = 'u8[524288]{0}', space=vmem, size = 0x80000, scoped, tag = 'input window, operand 4, single buffered']
    #allocation11 [shape = 'u8[2048]{0}', space=vmem, size = 0x800, scoped, tag = 'input window, operand 6, single buffered']
    #allocation12 [shape = 's32[1]{0}', space=sflag, size = 0x4, scoped, tag = 'scoped memory for tpu_custom_call.1']
    #allocation13 [shape = 'u8[131072]{0}', space=vmem, size = 0x20000, scoped, tag = 'input window, operand 7, single buffered']
    #allocation14 [shape = 'u8[4096]{0}', space=vmem, size = 0x1000, scoped, tag = 'output window, operand 0, single buffered']
    %14 = vsyncpa [#allocation3], 0
    %15 = vsyncpa [#allocation6], 0
    %16 = vsyncpa [#allocation9], 0
    %17 = vsyncpa [#allocation12], 0
    %18 = vsyncpa [#allocation4], 0
    // Predicated region
    $region2: #{tpu_custom_call.1} parent=1 // pred_check
      _
    $region3: #{tpu_custom_call.1} parent=1 // pred_check_branch
      %20 = sbr.rel (0) target = $region5
    $region4: #{tpu_custom_call.1} parent=1 // pred_region
      %22 = vsyncadd [#allocation3], 0
      %s24 = sshll.u32 %s0, 4
      %s25 = int_to_ptr.hbm [resolvable:$true] %s24
      %s26 = sshll.u32 [#allocation2], 4
      %s27 = int_to_ptr.vmem [resolvable:$true] %s26
      %29 = dma.hbm_to_vmem [thread:$0]  %s25, 128, %s27, [#allocation3]
    $region5: #{tpu_custom_call.1} parent=1 // pred_fallthru
      _
    // Predicated region
    $region6: #{tpu_custom_call.1} parent=1 // pred_check
      _
    $region7: #{tpu_custom_call.1} parent=1 // pred_check_branch
      %31 = sbr.rel (0) target = $region9
    $region8: #{tpu_custom_call.1} parent=1 // pred_region
      %33 = vsyncadd [#allocation6], 0
      %s34 = sshll.u32 %s1, 4
      %s35 = int_to_ptr.hbm [resolvable:$true] %s34
      %s36 = sshll.u32 [#allocation5], 4
      %s37 = int_to_ptr.vmem [resolvable:$true] %s36
      %42 = dma.hbm_to_vmem [thread:$0]  %s35, 1024, %s37, [#allocation6], 256, 256, 16
    $region9: #{tpu_custom_call.1} parent=1 // pred_fallthru
      _
    // Predicated region
    $region10: #{tpu_custom_call.1} parent=1 // pred_check
      _
    $region11: #{tpu_custom_call.1} parent=1 // pred_check_branch
      %44 = sbr.rel (0) target = $region13
    $region12: #{tpu_custom_call.1} parent=1 // pred_region
      %46 = vsyncadd [#allocation6], 0
      %s48 = sshll.u32 %s2, 4
      %s49 = int_to_ptr.hbm [resolvable:$true] %s48
      %s50 = sshll.u32 [#allocation7], 4
      %s51 = int_to_ptr.vmem [resolvable:$true] %s50
      %53 = dma.hbm_to_vmem [thread:$0]  %s49, 64, %s51, [#allocation6]
    $region13: #{tpu_custom_call.1} parent=1 // pred_fallthru
      _
    // Predicated region
    $region14: #{tpu_custom_call.1} parent=1 // pred_check
      _
    $region15: #{tpu_custom_call.1} parent=1 // pred_check_branch
      %55 = sbr.rel (0) target = $region17
    $region16: #{tpu_custom_call.1} parent=1 // pred_region
      %57 = vsyncadd [#allocation9], 0
      %s59 = sshll.u32 %s3, 4
      %s60 = int_to_ptr.hbm [resolvable:$true] %s59
      %s61 = sshll.u32 [#allocation8], 4
      %s62 = int_to_ptr.vmem [resolvable:$true] %s61
      %64 = dma.hbm_to_vmem [thread:$0]  %s60, 64, %s62, [#allocation9]
    $region17: #{tpu_custom_call.1} parent=1 // pred_fallthru
      _
    // Predicated region
    $region18: #{tpu_custom_call.1} parent=1 // pred_check
      _
    $region19: #{tpu_custom_call.1} parent=1 // pred_check_branch
      %66 = sbr.rel (0) target = $region21
    $region20: #{tpu_custom_call.1} parent=1 // pred_region
      %68 = vsyncadd [#allocation9], 0
      %s69 = sshll.u32 %s4, 4
      %s70 = int_to_ptr.hbm [resolvable:$true] %s69
      %s71 = sshll.u32 [#allocation10], 4
      %s72 = int_to_ptr.vmem [resolvable:$true] %s71
      %77 = dma.hbm_to_vmem [thread:$0]  %s70, 16384, %s72, [#allocation9], 256, 256, 16
    $region21: #{tpu_custom_call.1} parent=1 // pred_fallthru
      _
    // Predicated region
    $region22: #{tpu_custom_call.1} parent=1 // pred_check
      _
    $region23: #{tpu_custom_call.1} parent=1 // pred_check_branch
      %79 = sbr.rel (0) target = $region25
    $region24: #{tpu_custom_call.1} parent=1 // pred_region
      _
    $region25: #{tpu_custom_call.1} parent=1 // pred_fallthru
      _
    // Predicated region
    $region26: #{tpu_custom_call.1} parent=1 // pred_check
      _
    $region27: #{tpu_custom_call.1} parent=1 // pred_check_branch
      %81 = sbr.rel (0) target = $region29
    $region28: #{tpu_custom_call.1} parent=1 // pred_region
      %83 = vsyncadd [#allocation12], 0
      %s85 = sshll.u32 %s6, 4
      %s86 = int_to_ptr.hbm [resolvable:$true] %s85
      %s87 = sshll.u32 [#allocation11], 4
      %s88 = int_to_ptr.vmem [resolvable:$true] %s87
      %90 = dma.hbm_to_vmem [thread:$0]  %s86, 64, %s88, [#allocation12]
    $region29: #{tpu_custom_call.1} parent=1 // pred_fallthru
      _
    // Predicated region
    $region30: #{tpu_custom_call.1} parent=1 // pred_check
      _
    $region31: #{tpu_custom_call.1} parent=1 // pred_check_branch
      %92 = sbr.rel (0) target = $region33
    $region32: #{tpu_custom_call.1} parent=1 // pred_region
      %94 = vsyncadd [#allocation12], 0
      %s95 = sshll.u32 %s7, 4
      %s96 = int_to_ptr.hbm [resolvable:$true] %s95
      %s97 = sshll.u32 [#allocation13], 4
      %s98 = int_to_ptr.vmem [resolvable:$true] %s97
      %103 = dma.hbm_to_vmem [thread:$0]  %s96, 4096, %s98, [#allocation12], 64, 64, 4
    $region33: #{tpu_custom_call.1} parent=1 // pred_fallthru
      _
    // Predicated region
    $region34: #{tpu_custom_call.1} parent=1 // pred_check
      _
    $region35: #{tpu_custom_call.1} parent=1 // pred_check_branch
      %105 = sbr.rel (0) target = $region37
    $region36: #{tpu_custom_call.1} parent=1 // pred_region
      _
    $region37: #{tpu_custom_call.1} parent=1 // pred_fallthru
      _
    // Predicated region
    $region38: #{tpu_custom_call.1} parent=1 // pred_check
      _
    $region39: #{tpu_custom_call.1} parent=1 // pred_check_branch
      %107 = sbr.rel (0) target = $region41
    $region40: #{tpu_custom_call.1} parent=1 // pred_region
      %109 = dma.done [#allocation3], 128
    $region41: #{tpu_custom_call.1} parent=1 // pred_fallthru
      _
    // Predicated region
    $region42: #{tpu_custom_call.1} parent=1 // pred_check
      _
    $region43: #{tpu_custom_call.1} parent=1 // pred_check_branch
      %111 = sbr.rel (0) target = $region45
    $region44: #{tpu_custom_call.1} parent=1 // pred_region
      %113 = dma.done [#allocation6], 1024
    $region45: #{tpu_custom_call.1} parent=1 // pred_fallthru
      _
    // Predicated region
    $region46: #{tpu_custom_call.1} parent=1 // pred_check
      _
    $region47: #{tpu_custom_call.1} parent=1 // pred_check_branch
      %115 = sbr.rel (0) target = $region49
    $region48: #{tpu_custom_call.1} parent=1 // pred_region
      %117 = dma.done [#allocation6], 64
    $region49: #{tpu_custom_call.1} parent=1 // pred_fallthru
      _
    // Predicated region
    $region50: #{tpu_custom_call.1} parent=1 // pred_check
      _
    $region51: #{tpu_custom_call.1} parent=1 // pred_check_branch
      %119 = sbr.rel (0) target = $region53
    $region52: #{tpu_custom_call.1} parent=1 // pred_region
      %121 = dma.done [#allocation9], 64
    $region53: #{tpu_custom_call.1} parent=1 // pred_fallthru
      _
    // Predicated region
    $region54: #{tpu_custom_call.1} parent=1 // pred_check
      _
    $region55: #{tpu_custom_call.1} parent=1 // pred_check_branch
      %123 = sbr.rel (0) target = $region57
    $region56: #{tpu_custom_call.1} parent=1 // pred_region
      %125 = dma.done [#allocation9], 16384
    $region57: #{tpu_custom_call.1} parent=1 // pred_fallthru
      _
    // Predicated region
    $region58: #{tpu_custom_call.1} parent=1 // pred_check
      _
    $region59: #{tpu_custom_call.1} parent=1 // pred_check_branch
      %127 = sbr.rel (0) target = $region61
    $region60: #{tpu_custom_call.1} parent=1 // pred_region
      %129 = dma.done [#allocation12], 64
    $region61: #{tpu_custom_call.1} parent=1 // pred_fallthru
      _
    // Predicated region
    $region62: #{tpu_custom_call.1} parent=1 // pred_check
      _
    $region63: #{tpu_custom_call.1} parent=1 // pred_check_branch
      %131 = sbr.rel (0) target = $region65
    $region64: #{tpu_custom_call.1} parent=1 // pred_region
      %133 = dma.done [#allocation12], 4096
    $region65: #{tpu_custom_call.1} parent=1 // pred_fallthru
      _
    %v135 = vld [vmem:[#allocation2] sm:$0xff]
    %v136 = vpack.c.bf16 %v135, %v135
    %v137 = vld [vmem:[#allocation5] sm:$0xff]
    %v138 = vld [vmem:[#allocation5 + $0x8] sm:$0xff]
    %v139 = vld [vmem:[#allocation5 + $0x10] sm:$0xff]
    %v140 = vld [vmem:[#allocation5 + $0x18] sm:$0xff]
    %v141 = vld [vmem:[#allocation5 + $0x20] sm:$0xff]
    %v142 = vld [vmem:[#allocation5 + $0x28] sm:$0xff]
    %v143 = vld [vmem:[#allocation5 + $0x30] sm:$0xff]
    %v144 = vld [vmem:[#allocation5 + $0x38] sm:$0xff]
    %v153 = vunpack.c.l.b16 %v137
    %v154 = vunpack.c.h.b16 %v137
    %v155 = vunpack.c.l.b16 %v138
    %v156 = vunpack.c.h.b16 %v138
    %v157 = vunpack.c.l.b16 %v139
    %v158 = vunpack.c.h.b16 %v139
    %v159 = vunpack.c.l.b16 %v140
    %v160 = vunpack.c.h.b16 %v140
    %v161 = vunpack.c.l.b16 %v141
    %v162 = vunpack.c.h.b16 %v141
    %v163 = vunpack.c.l.b16 %v142
    %v164 = vunpack.c.h.b16 %v142
    %v165 = vunpack.c.l.b16 %v143
    %v166 = vunpack.c.h.b16 %v143
    %v167 = vunpack.c.l.b16 %v144
    %v168 = vunpack.c.h.b16 %v144
    %v169 = vpack.c.b16 %v157, %v153
    %v170 = vpack.c.b16 %v158, %v154
    %v171 = vpack.c.b16 %v159, %v155
    %v172 = vpack.c.b16 %v160, %v156
    %v173 = vpack.c.b16 %v165, %v161
    %v174 = vpack.c.b16 %v166, %v162
    %v175 = vpack.c.b16 %v167, %v163
    %v176 = vpack.c.b16 %v168, %v164
    %vm185 = vcmask 261120
    %v187 = vsel %vm185, %v136, 0
    %189 = vmatpush.bf16.msra.mxu0 0
    %190 = vmatpush.bf16.msra.mxu0 0
    %191 = vmatpush.bf16.msra.mxu0 0
    %192 = vmatpush.bf16.msra.mxu0 0
    %193 = vmatpush.bf16.msra.mxu0 0
    %194 = vmatpush.bf16.msra.mxu0 0
    %195 = vmatpush.bf16.msra.mxu0 %v173
    %196 = vmatpush.bf16.msra.mxu0 %v169
    %197 = vmatmul.bf16.gmra.mxu0 %v187
    %v198 = vpop.f32.mrf.mxu0
    %v199 = vadd.f32 0.0, %v198
    %v200 = vpop.f32.mrf.mxu0
    %201 = vdwg.mxu0
    %202 = vmatpush.bf16.msra.mxu0 0
    %203 = vmatpush.bf16.msra.mxu0 0
    %204 = vmatpush.bf16.msra.mxu0 0
    %205 = vmatpush.bf16.msra.mxu0 0
    %206 = vmatpush.bf16.msra.mxu0 0
    %207 = vmatpush.bf16.msra.mxu0 0
    %208 = vmatpush.bf16.msra.mxu0 %v174
    %209 = vmatpush.bf16.msra.mxu0 %v170
    %210 = vmatmul.bf16.gmra.mxu0 %v187
    %v211 = vpop.f32.mrf.mxu0
    %v212 = vadd.f32 0.0, %v211
    %v213 = vpop.f32.mrf.mxu0
    %214 = vdwg.mxu0
    %215 = vmatpush.bf16.msra.mxu0 0
    %216 = vmatpush.bf16.msra.mxu0 0
    %217 = vmatpush.bf16.msra.mxu0 0
    %218 = vmatpush.bf16.msra.mxu0 0
    %219 = vmatpush.bf16.msra.mxu0 0
    %220 = vmatpush.bf16.msra.mxu0 0
    %221 = vmatpush.bf16.msra.mxu0 %v175
    %222 = vmatpush.bf16.msra.mxu0 %v171
    %223 = vmatmul.bf16.gmra.mxu0 %v187
    %v224 = vpop.f32.mrf.mxu0
    %v225 = vadd.f32 0.0, %v224
    %v226 = vpop.f32.mrf.mxu0
    %227 = vdwg.mxu0
    %228 = vmatpush.bf16.msra.mxu0 0
    %229 = vmatpush.bf16.msra.mxu0 0
    %230 = vmatpush.bf16.msra.mxu0 0
    %231 = vmatpush.bf16.msra.mxu0 0
    %232 = vmatpush.bf16.msra.mxu0 0
    %233 = vmatpush.bf16.msra.mxu0 0
    %234 = vmatpush.bf16.msra.mxu0 %v176
    %235 = vmatpush.bf16.msra.mxu0 %v172
    %236 = vmatmul.bf16.gmra.mxu0 %v187
    %v237 = vpop.f32.mrf.mxu0
    %v238 = vadd.f32 0.0, %v237
    %v239 = vpop.f32.mrf.mxu0
    %240 = vdwg.mxu0
    %v241 = vrot.slane %v199, 4
    %v242 = vadd.f32 %v199, %v241
    %v243 = vrot.slane %v242, 2
    %v244 = vadd.f32 %v242, %v243
    %v245 = vrot.slane %v244, 1
    %v246 = vadd.f32 %v244, %v245
    %v247 = vrot.slane %v212, 4
    %v248 = vadd.f32 %v212, %v247
    %v249 = vrot.slane %v248, 2
    %v250 = vadd.f32 %v248, %v249
    %v251 = vrot.slane %v250, 1
    %v252 = vadd.f32 %v250, %v251
    %v253 = vrot.slane %v225, 4
    %v254 = vadd.f32 %v225, %v253
    %v255 = vrot.slane %v254, 2
    %v256 = vadd.f32 %v254, %v255
    %v257 = vrot.slane %v256, 1
    %v258 = vadd.f32 %v256, %v257
    %v259 = vrot.slane %v238, 4
    %v260 = vadd.f32 %v238, %v259
    %v261 = vrot.slane %v260, 2
    %v262 = vadd.f32 %v260, %v261
    %v263 = vrot.slane %v262, 1
    %v264 = vadd.f32 %v262, %v263
    %v265 = vrcp.pop 8.0
    %v266 = vmul.f32 8.0, %v265
    %v267 = vsub.f32 1.0, %v266
    %v268 = vmul.f32 %v265, %v267
    %v269 = vadd.f32 %v265, %v268
    %vm270 = vweird.f32 %v265
    %v271 = vsel %vm270, %v265, %v269
    %v272 = vmul.f32 %v246, %v271
    %v273 = vmul.f32 %v252, %v271
    %v274 = vmul.f32 %v258, %v271
    %v275 = vmul.f32 %v264, %v271
    %v276 = vmul.f32 %v199, %v199
    %v277 = vmul.f32 %v212, %v212
    %v278 = vmul.f32 %v225, %v225
    %v279 = vmul.f32 %v238, %v238
    %v280 = vrot.slane %v276, 4
    %v281 = vadd.f32 %v276, %v280
    %v282 = vrot.slane %v281, 2
    %v283 = vadd.f32 %v281, %v282
    %v284 = vrot.slane %v283, 1
    %v285 = vadd.f32 %v283, %v284
    %v286 = vrot.slane %v277, 4
    %v287 = vadd.f32 %v277, %v286
    %v288 = vrot.slane %v287, 2
    %v289 = vadd.f32 %v287, %v288
    %v290 = vrot.slane %v289, 1
    %v291 = vadd.f32 %v289, %v290
    %v292 = vrot.slane %v278, 4
    %v293 = vadd.f32 %v278, %v292
    %v294 = vrot.slane %v293, 2
    %v295 = vadd.f32 %v293, %v294
    %v296 = vrot.slane %v295, 1
    %v297 = vadd.f32 %v295, %v296
    %v298 = vrot.slane %v279, 4
    %v299 = vadd.f32 %v279, %v298
    %v300 = vrot.slane %v299, 2
    %v301 = vadd.f32 %v299, %v300
    %v302 = vrot.slane %v301, 1
    %v303 = vadd.f32 %v301, %v302
    %v304 = vmul.f32 %v285, %v271
    %v305 = vmul.f32 %v291, %v271
    %v306 = vmul.f32 %v297, %v271
    %v307 = vmul.f32 %v303, %v271
    %v308 = vmul.f32 %v272, %v272
    %v309 = vmul.f32 %v273, %v273
    %v310 = vmul.f32 %v274, %v274
    %v311 = vmul.f32 %v275, %v275
    %v312 = vsub.f32 %v304, %v308
    %v313 = vsub.f32 %v305, %v309
    %v314 = vsub.f32 %v306, %v310
    %v315 = vsub.f32 %v307, %v311
    %v316 = vmax.f32 %v312, 0.0
    %v317 = vmax.f32 %v313, 0.0
    %v318 = vmax.f32 %v314, 0.0
    %v319 = vmax.f32 %v315, 0.0
    %v320 = vld [vmem:[#allocation7] sm:$0xf]
    %v321 = vadd.f32 %v316, 1e-05
    %v322 = vadd.f32 %v317, 1e-05
    %v323 = vadd.f32 %v318, 1e-05
    %v324 = vadd.f32 %v319, 1e-05
    %v325 = vrsqrt.pop %v321
    %v326 = vmul.f32 %v325, %v321
    %v327 = vmul.f32 %v326, %v325
    %v328 = vmul.f32 0.5, %v327
    %v329 = vsub.f32 1.5, %v328
    %v330 = vmul.f32 %v325, %v329
    %vm331 = vweird.f32 %v321
    %vm332 = vweird.f32 %v325
    %vm333 = vmor %vm331, %vm332
    %v334 = vsel %vm333, %v325, %v330
    %v335 = vrsqrt.pop %v322
    %v336 = vmul.f32 %v335, %v322
    %v337 = vmul.f32 %v336, %v335
    %v338 = vmul.f32 0.5, %v337
    %v339 = vsub.f32 1.5, %v338
    %v340 = vmul.f32 %v335, %v339
    %vm341 = vweird.f32 %v322
    %vm342 = vweird.f32 %v335
    %vm343 = vmor %vm341, %vm342
    %v344 = vsel %vm343, %v335, %v340
    %v345 = vrsqrt.pop %v323
    %v346 = vmul.f32 %v345, %v323
    %v347 = vmul.f32 %v346, %v345
    %v348 = vmul.f32 0.5, %v347
    %v349 = vsub.f32 1.5, %v348
    %v350 = vmul.f32 %v345, %v349
    %vm351 = vweird.f32 %v323
    %vm352 = vweird.f32 %v345
    %vm353 = vmor %vm351, %vm352
    %v354 = vsel %vm353, %v345, %v350
    %v355 = vrsqrt.pop %v324
    %v356 = vmul.f32 %v355, %v324
    %v357 = vmul.f32 %v356, %v355
    %v358 = vmul.f32 0.5, %v357
    %v359 = vsub.f32 1.5, %v358
    %v360 = vmul.f32 %v355, %v359
    %vm361 = vweird.f32 %v324
    %vm362 = vweird.f32 %v355
    %vm363 = vmor %vm361, %vm362
    %v364 = vsel %vm363, %v355, %v360
    %v369 = vrot.slane %v344, 7
    %v370 = vrot.slane %v354, 6
    %v371 = vrot.slane %v364, 5
    %vm372 = vcmask 1040384
    %v373 = vsel %vm372, %v334, %v369
    %vm374 = vcmask 1042434
    %v375 = vsel %vm374, %v370, %v371
    %vm376 = vcmask 1041408
    %v377 = vsel %vm376, %v373, %v375
    %v379 = vmul.f32 %v320, %v377
    %v380 = vld [vmem:[#allocation8] sm:$0xf]
    %v382 = vperm.slane %v379, 0
    %v383 = vperm.slane %v379, 1
    %v384 = vperm.slane %v379, 2
    %v385 = vperm.slane %v379, 3
    %v390 = vmul.f32 %v272, %v382
    %v391 = vmul.f32 %v273, %v383
    %v392 = vmul.f32 %v274, %v384
    %v393 = vmul.f32 %v275, %v385
    %v398 = vrot.slane %v391, 7
    %v399 = vrot.slane %v392, 6
    %v400 = vrot.slane %v393, 5
    %v401 = vsel %vm372, %v390, %v398
    %v402 = vsel %vm374, %v399, %v400
    %v403 = vsel %vm376, %v401, %v402
    %v405 = vsub.f32 %v380, %v403
    %v406 = vmul.f32 %v199, %v382
    %v407 = vmul.f32 %v212, %v383
    %v408 = vmul.f32 %v225, %v384
    %v409 = vmul.f32 %v238, %v385
    %v411 = vperm.slane %v405, 0
    %v412 = vperm.slane %v405, 1
    %v413 = vperm.slane %v405, 2
    %v414 = vperm.slane %v405, 3
    %v419 = vadd.f32 %v406, %v411
    %v420 = vadd.f32 %v407, %v412
    %v421 = vadd.f32 %v408, %v413
    %v422 = vadd.f32 %v409, %v414
    %v423 = vmax.f32 %v419, 0.0
    %v424 = vmax.f32 %v420, 0.0
    %v425 = vmax.f32 %v421, 0.0
    %v426 = vmax.f32 %v422, 0.0
    %v427 = vpack.c.bf16 %v423, %v423
    %v428 = vpack.c.bf16 %v424, %v424
    %v429 = vpack.c.bf16 %v425, %v425
    %v430 = vpack.c.bf16 %v426, %v426
    %v431 = vld [vmem:[#allocation10] sm:$0xff]
    %v432 = vld [vmem:[#allocation10 + $0x8] sm:$0xff]
    %v433 = vld [vmem:[#allocation10 + $0x10] sm:$0xff]
    %v434 = vld [vmem:[#allocation10 + $0x18] sm:$0xff]
    %v435 = vld [vmem:[#allocation10 + $0x20] sm:$0xff]
    %v436 = vld [vmem:[#allocation10 + $0x28] sm:$0xff]
    %v437 = vld [vmem:[#allocation10 + $0x30] sm:$0xff]
    %v438 = vld [vmem:[#allocation10 + $0x38] sm:$0xff]
    %v439 = vld [vmem:[#allocation10 + $0x40] sm:$0xff]
    %v440 = vld [vmem:[#allocation10 + $0x48] sm:$0xff]
    %v441 = vld [vmem:[#allocation10 + $0x50] sm:$0xff]
    %v442 = vld [vmem:[#allocation10 + $0x58] sm:$0xff]
    %v443 = vld [vmem:[#allocation10 + $0x60] sm:$0xff]
    %v444 = vld [vmem:[#allocation10 + $0x68] sm:$0xff]
    %v445 = vld [vmem:[#allocation10 + $0x70] sm:$0xff]
    %v446 = vld [vmem:[#allocation10 + $0x78] sm:$0xff]
    %v447 = vld [vmem:[#allocation10 + $0x80] sm:$0xff]
    %v448 = vld [vmem:[#allocation10 + $0x88] sm:$0xff]
    %v449 = vld [vmem:[#allocation10 + $0x90] sm:$0xff]
    %v450 = vld [vmem:[#allocation10 + $0x98] sm:$0xff]
    %v451 = vld [vmem:[#allocation10 + $0xa0] sm:$0xff]
    %v452 = vld [vmem:[#allocation10 + $0xa8] sm:$0xff]
    %v453 = vld [vmem:[#allocation10 + $0xb0] sm:$0xff]
    %v454 = vld [vmem:[#allocation10 + $0xb8] sm:$0xff]
    %v455 = vld [vmem:[#allocation10 + $0xc0] sm:$0xff]
    %v456 = vld [vmem:[#allocation10 + $0xc8] sm:$0xff]
    %v457 = vld [vmem:[#allocation10 + $0xd0] sm:$0xff]
    %v458 = vld [vmem:[#allocation10 + $0xd8] sm:$0xff]
    %v459 = vld [vmem:[#allocation10 + $0xe0] sm:$0xff]
    %v460 = vld [vmem:[#allocation10 + $0xe8] sm:$0xff]
    %v461 = vld [vmem:[#allocation10 + $0xf0] sm:$0xff]
    %v462 = vld [vmem:[#allocation10 + $0xf8] sm:$0xff]
    %v463 = vld [vmem:[#allocation10 + $0x100] sm:$0xff]
    %v464 = vld [vmem:[#allocation10 + $0x108] sm:$0xff]
    %v465 = vld [vmem:[#allocation10 + $0x110] sm:$0xff]
    %v466 = vld [vmem:[#allocation10 + $0x118] sm:$0xff]
    %v467 = vld [vmem:[#allocation10 + $0x120] sm:$0xff]
    %v468 = vld [vmem:[#allocation10 + $0x128] sm:$0xff]
    %v469 = vld [vmem:[#allocation10 + $0x130] sm:$0xff]
    %v470 = vld [vmem:[#allocation10 + $0x138] sm:$0xff]
    %v471 = vld [vmem:[#allocation10 + $0x140] sm:$0xff]
    %v472 = vld [vmem:[#allocation10 + $0x148] sm:$0xff]
    %v473 = vld [vmem:[#allocation10 + $0x150] sm:$0xff]
    %v474 = vld [vmem:[#allocation10 + $0x158] sm:$0xff]
    %v475 = vld [vmem:[#allocation10 + $0x160] sm:$0xff]
    %v476 = vld [vmem:[#allocation10 + $0x168] sm:$0xff]
    %v477 = vld [vmem:[#allocation10 + $0x170] sm:$0xff]
    %v478 = vld [vmem:[#allocation10 + $0x178] sm:$0xff]
    %v479 = vld [vmem:[#allocation10 + $0x180] sm:$0xff]
    %v480 = vld [vmem:[#allocation10 + $0x188] sm:$0xff]
    %v481 = vld [vmem:[#allocation10 + $0x190] sm:$0xff]
    %v482 = vld [vmem:[#allocation10 + $0x198] sm:$0xff]
    %v483 = vld [vmem:[#allocation10 + $0x1a0] sm:$0xff]
    %v484 = vld [vmem:[#allocation10 + $0x1a8] sm:$0xff]
    %v485 = vld [vmem:[#allocation10 + $0x1b0] sm:$0xff]
    %v486 = vld [vmem:[#allocation10 + $0x1b8] sm:$0xff]
    %v487 = vld [vmem:[#allocation10 + $0x1c0] sm:$0xff]
    %v488 = vld [vmem:[#allocation10 + $0x1c8] sm:$0xff]
    %v489 = vld [vmem:[#allocation10 + $0x1d0] sm:$0xff]
    %v490 = vld [vmem:[#allocation10 + $0x1d8] sm:$0xff]
    %v491 = vld [vmem:[#allocation10 + $0x1e0] sm:$0xff]
    %v492 = vld [vmem:[#allocation10 + $0x1e8] sm:$0xff]
    %v493 = vld [vmem:[#allocation10 + $0x1f0] sm:$0xff]
    %v494 = vld [vmem:[#allocation10 + $0x1f8] sm:$0xff]
    %v495 = vld [vmem:[#allocation10 + $0x200] sm:$0xff]
    %v496 = vld [vmem:[#allocation10 + $0x208] sm:$0xff]
    %v497 = vld [vmem:[#allocation10 + $0x210] sm:$0xff]
    %v498 = vld [vmem:[#allocation10 + $0x218] sm:$0xff]
    %v499 = vld [vmem:[#allocation10 + $0x220] sm:$0xff]
    %v500 = vld [vmem:[#allocation10 + $0x228] sm:$0xff]
    %v501 = vld [vmem:[#allocation10 + $0x230] sm:$0xff]
    %v502 = vld [vmem:[#allocation10 + $0x238] sm:$0xff]
    %v503 = vld [vmem:[#allocation10 + $0x240] sm:$0xff]
    %v504 = vld [vmem:[#allocation10 + $0x248] sm:$0xff]
    %v505 = vld [vmem:[#allocation10 + $0x250] sm:$0xff]
    %v506 = vld [vmem:[#allocation10 + $0x258] sm:$0xff]
    %v507 = vld [vmem:[#allocation10 + $0x260] sm:$0xff]
    %v508 = vld [vmem:[#allocation10 + $0x268] sm:$0xff]
    %v509 = vld [vmem:[#allocation10 + $0x270] sm:$0xff]
    %v510 = vld [vmem:[#allocation10 + $0x278] sm:$0xff]
    %v511 = vld [vmem:[#allocation10 + $0x280] sm:$0xff]
    %v512 = vld [vmem:[#allocation10 + $0x288] sm:$0xff]
    %v513 = vld [vmem:[#allocation10 + $0x290] sm:$0xff]
    %v514 = vld [vmem:[#allocation10 + $0x298] sm:$0xff]
    %v515 = vld [vmem:[#allocation10 + $0x2a0] sm:$0xff]
    %v516 = vld [vmem:[#allocation10 + $0x2a8] sm:$0xff]
    %v517 = vld [vmem:[#allocation10 + $0x2b0] sm:$0xff]
    %v518 = vld [vmem:[#allocation10 + $0x2b8] sm:$0xff]
    %v519 = vld [vmem:[#allocation10 + $0x2c0] sm:$0xff]
    %v520 = vld [vmem:[#allocation10 + $0x2c8] sm:$0xff]
    %v521 = vld [vmem:[#allocation10 + $0x2d0] sm:$0xff]
    %v522 = vld [vmem:[#allocation10 + $0x2d8] sm:$0xff]
    %v523 = vld [vmem:[#allocation10 + $0x2e0] sm:$0xff]
    %v524 = vld [vmem:[#allocation10 + $0x2e8] sm:$0xff]
    %v525 = vld [vmem:[#allocation10 + $0x2f0] sm:$0xff]
    %v526 = vld [vmem:[#allocation10 + $0x2f8] sm:$0xff]
    %v527 = vld [vmem:[#allocation10 + $0x300] sm:$0xff]
    %v528 = vld [vmem:[#allocation10 + $0x308] sm:$0xff]
    %v529 = vld [vmem:[#allocation10 + $0x310] sm:$0xff]
    %v530 = vld [vmem:[#allocation10 + $0x318] sm:$0xff]
    %v531 = vld [vmem:[#allocation10 + $0x320] sm:$0xff]
    %v532 = vld [vmem:[#allocation10 + $0x328] sm:$0xff]
    %v533 = vld [vmem:[#allocation10 + $0x330] sm:$0xff]
    %v534 = vld [vmem:[#allocation10 + $0x338] sm:$0xff]
    %v535 = vld [vmem:[#allocation10 + $0x340] sm:$0xff]
    %v536 = vld [vmem:[#allocation10 + $0x348] sm:$0xff]
    %v537 = vld [vmem:[#allocation10 + $0x350] sm:$0xff]
    %v538 = vld [vmem:[#allocation10 + $0x358] sm:$0xff]
    %v539 = vld [vmem:[#allocation10 + $0x360] sm:$0xff]
    %v540 = vld [vmem:[#allocation10 + $0x368] sm:$0xff]
    %v541 = vld [vmem:[#allocation10 + $0x370] sm:$0xff]
    %v542 = vld [vmem:[#allocation10 + $0x378] sm:$0xff]
    %v543 = vld [vmem:[#allocation10 + $0x380] sm:$0xff]
    %v544 = vld [vmem:[#allocation10 + $0x388] sm:$0xff]
    %v545 = vld [vmem:[#allocation10 + $0x390] sm:$0xff]
    %v546 = vld [vmem:[#allocation10 + $0x398] sm:$0xff]
    %v547 = vld [vmem:[#allocation10 + $0x3a0] sm:$0xff]
    %v548 = vld [vmem:[#allocation10 + $0x3a8] sm:$0xff]
    %v549 = vld [vmem:[#allocation10 + $0x3b0] sm:$0xff]
    %v550 = vld [vmem:[#allocation10 + $0x3b8] sm:$0xff]
    %v551 = vld [vmem:[#allocation10 + $0x3c0] sm:$0xff]
    %v552 = vld [vmem:[#allocation10 + $0x3c8] sm:$0xff]
    %v553 = vld [vmem:[#allocation10 + $0x3d0] sm:$0xff]
    %v554 = vld [vmem:[#allocation10 + $0x3d8] sm:$0xff]
    %v555 = vld [vmem:[#allocation10 + $0x3e0] sm:$0xff]
    %v556 = vld [vmem:[#allocation10 + $0x3e8] sm:$0xff]
    %v557 = vld [vmem:[#allocation10 + $0x3f0] sm:$0xff]
    %v558 = vld [vmem:[#allocation10 + $0x3f8] sm:$0xff]
    %v687 = vunpack.c.l.b16 %v431
    %v688 = vunpack.c.h.b16 %v431
    %v689 = vunpack.c.l.b16 %v432
    %v690 = vunpack.c.h.b16 %v432
    %v691 = vunpack.c.l.b16 %v433
    %v692 = vunpack.c.h.b16 %v433
    %v693 = vunpack.c.l.b16 %v434
    %v694 = vunpack.c.h.b16 %v434
    %v695 = vunpack.c.l.b16 %v435
    %v696 = vunpack.c.h.b16 %v435
    %v697 = vunpack.c.l.b16 %v436
    %v698 = vunpack.c.h.b16 %v436
    %v699 = vunpack.c.l.b16 %v437
    %v700 = vunpack.c.h.b16 %v437
    %v701 = vunpack.c.l.b16 %v438
    %v702 = vunpack.c.h.b16 %v438
    %v703 = vunpack.c.l.b16 %v439
    %v704 = vunpack.c.h.b16 %v439
    %v705 = vunpack.c.l.b16 %v440
    %v706 = vunpack.c.h.b16 %v440
    %v707 = vunpack.c.l.b16 %v441
    %v708 = vunpack.c.h.b16 %v441
    %v709 = vunpack.c.l.b16 %v442
    %v710 = vunpack.c.h.b16 %v442
    %v711 = vunpack.c.l.b16 %v443
    %v712 = vunpack.c.h.b16 %v443
    %v713 = vunpack.c.l.b16 %v444
    %v714 = vunpack.c.h.b16 %v444
    %v715 = vunpack.c.l.b16 %v445
    %v716 = vunpack.c.h.b16 %v445
    %v717 = vunpack.c.l.b16 %v446
    %v718 = vunpack.c.h.b16 %v446
    %v719 = vunpack.c.l.b16 %v447
    %v720 = vunpack.c.h.b16 %v447
    %v721 = vunpack.c.l.b16 %v448
    %v722 = vunpack.c.h.b16 %v448
    %v723 = vunpack.c.l.b16 %v449
    %v724 = vunpack.c.h.b16 %v449
    %v725 = vunpack.c.l.b16 %v450
    %v726 = vunpack.c.h.b16 %v450
    %v727 = vunpack.c.l.b16 %v451
    %v728 = vunpack.c.h.b16 %v451
    %v729 = vunpack.c.l.b16 %v452
    %v730 = vunpack.c.h.b16 %v452
    %v731 = vunpack.c.l.b16 %v453
    %v732 = vunpack.c.h.b16 %v453
    %v733 = vunpack.c.l.b16 %v454
    %v734 = vunpack.c.h.b16 %v454
    %v735 = vunpack.c.l.b16 %v455
    %v736 = vunpack.c.h.b16 %v455
    %v737 = vunpack.c.l.b16 %v456
    %v738 = vunpack.c.h.b16 %v456
    %v739 = vunpack.c.l.b16 %v457
    %v740 = vunpack.c.h.b16 %v457
    %v741 = vunpack.c.l.b16 %v458
    %v742 = vunpack.c.h.b16 %v458
    %v743 = vunpack.c.l.b16 %v459
    %v744 = vunpack.c.h.b16 %v459
    %v745 = vunpack.c.l.b16 %v460
    %v746 = vunpack.c.h.b16 %v460
    %v747 = vunpack.c.l.b16 %v461
    %v748 = vunpack.c.h.b16 %v461
    %v749 = vunpack.c.l.b16 %v462
    %v750 = vunpack.c.h.b16 %v462
    %v751 = vunpack.c.l.b16 %v463
    %v752 = vunpack.c.h.b16 %v463
    %v753 = vunpack.c.l.b16 %v464
    %v754 = vunpack.c.h.b16 %v464
    %v755 = vunpack.c.l.b16 %v465
    %v756 = vunpack.c.h.b16 %v465
    %v757 = vunpack.c.l.b16 %v466
    %v758 = vunpack.c.h.b16 %v466
    %v759 = vunpack.c.l.b16 %v467
    %v760 = vunpack.c.h.b16 %v467
    %v761 = vunpack.c.l.b16 %v468
    %v762 = vunpack.c.h.b16 %v468
    %v763 = vunpack.c.l.b16 %v469
    %v764 = vunpack.c.h.b16 %v469
    %v765 = vunpack.c.l.b16 %v470
    %v766 = vunpack.c.h.b16 %v470
    %v767 = vunpack.c.l.b16 %v471
    %v768 = vunpack.c.h.b16 %v471
    %v769 = vunpack.c.l.b16 %v472
    %v770 = vunpack.c.h.b16 %v472
    %v771 = vunpack.c.l.b16 %v473
    %v772 = vunpack.c.h.b16 %v473
    %v773 = vunpack.c.l.b16 %v474
    %v774 = vunpack.c.h.b16 %v474
    %v775 = vunpack.c.l.b16 %v475
    %v776 = vunpack.c.h.b16 %v475
    %v777 = vunpack.c.l.b16 %v476
    %v778 = vunpack.c.h.b16 %v476
    %v779 = vunpack.c.l.b16 %v477
    %v780 = vunpack.c.h.b16 %v477
    %v781 = vunpack.c.l.b16 %v478
    %v782 = vunpack.c.h.b16 %v478
    %v783 = vunpack.c.l.b16 %v479
    %v784 = vunpack.c.h.b16 %v479
    %v785 = vunpack.c.l.b16 %v480
    %v786 = vunpack.c.h.b16 %v480
    %v787 = vunpack.c.l.b16 %v481
    %v788 = vunpack.c.h.b16 %v481
    %v789 = vunpack.c.l.b16 %v482
    %v790 = vunpack.c.h.b16 %v482
    %v791 = vunpack.c.l.b16 %v483
    %v792 = vunpack.c.h.b16 %v483
    %v793 = vunpack.c.l.b16 %v484
    %v794 = vunpack.c.h.b16 %v484
    %v795 = vunpack.c.l.b16 %v485
    %v796 = vunpack.c.h.b16 %v485
    %v797 = vunpack.c.l.b16 %v486
    %v798 = vunpack.c.h.b16 %v486
    %v799 = vunpack.c.l.b16 %v487
    %v800 = vunpack.c.h.b16 %v487
    %v801 = vunpack.c.l.b16 %v488
    %v802 = vunpack.c.h.b16 %v488
    %v803 = vunpack.c.l.b16 %v489
    %v804 = vunpack.c.h.b16 %v489
    %v805 = vunpack.c.l.b16 %v490
    %v806 = vunpack.c.h.b16 %v490
    %v807 = vunpack.c.l.b16 %v491
    %v808 = vunpack.c.h.b16 %v491
    %v809 = vunpack.c.l.b16 %v492
    %v810 = vunpack.c.h.b16 %v492
    %v811 = vunpack.c.l.b16 %v493
    %v812 = vunpack.c.h.b16 %v493
    %v813 = vunpack.c.l.b16 %v494
    %v814 = vunpack.c.h.b16 %v494
    %v815 = vunpack.c.l.b16 %v495
    %v816 = vunpack.c.h.b16 %v495
    %v817 = vunpack.c.l.b16 %v496
    %v818 = vunpack.c.h.b16 %v496
    %v819 = vunpack.c.l.b16 %v497
    %v820 = vunpack.c.h.b16 %v497
    %v821 = vunpack.c.l.b16 %v498
    %v822 = vunpack.c.h.b16 %v498
    %v823 = vunpack.c.l.b16 %v499
    %v824 = vunpack.c.h.b16 %v499
    %v825 = vunpack.c.l.b16 %v500
    %v826 = vunpack.c.h.b16 %v500
    %v827 = vunpack.c.l.b16 %v501
    %v828 = vunpack.c.h.b16 %v501
    %v829 = vunpack.c.l.b16 %v502
    %v830 = vunpack.c.h.b16 %v502
    %v831 = vunpack.c.l.b16 %v503
    %v832 = vunpack.c.h.b16 %v503
    %v833 = vunpack.c.l.b16 %v504
    %v834 = vunpack.c.h.b16 %v504
    %v835 = vunpack.c.l.b16 %v505
    %v836 = vunpack.c.h.b16 %v505
    %v837 = vunpack.c.l.b16 %v506
    %v838 = vunpack.c.h.b16 %v506
    %v839 = vunpack.c.l.b16 %v507
    %v840 = vunpack.c.h.b16 %v507
    %v841 = vunpack.c.l.b16 %v508
    %v842 = vunpack.c.h.b16 %v508
    %v843 = vunpack.c.l.b16 %v509
    %v844 = vunpack.c.h.b16 %v509
    %v845 = vunpack.c.l.b16 %v510
    %v846 = vunpack.c.h.b16 %v510
    %v847 = vunpack.c.l.b16 %v511
    %v848 = vunpack.c.h.b16 %v511
    %v849 = vunpack.c.l.b16 %v512
    %v850 = vunpack.c.h.b16 %v512
    %v851 = vunpack.c.l.b16 %v513
    %v852 = vunpack.c.h.b16 %v513
    %v853 = vunpack.c.l.b16 %v514
    %v854 = vunpack.c.h.b16 %v514
    %v855 = vunpack.c.l.b16 %v515
    %v856 = vunpack.c.h.b16 %v515
    %v857 = vunpack.c.l.b16 %v516
    %v858 = vunpack.c.h.b16 %v516
    %v859 = vunpack.c.l.b16 %v517
    %v860 = vunpack.c.h.b16 %v517
    %v861 = vunpack.c.l.b16 %v518
    %v862 = vunpack.c.h.b16 %v518
    %v863 = vunpack.c.l.b16 %v519
    %v864 = vunpack.c.h.b16 %v519
    %v865 = vunpack.c.l.b16 %v520
    %v866 = vunpack.c.h.b16 %v520
    %v867 = vunpack.c.l.b16 %v521
    %v868 = vunpack.c.h.b16 %v521
    %v869 = vunpack.c.l.b16 %v522
    %v870 = vunpack.c.h.b16 %v522
    %v871 = vunpack.c.l.b16 %v523
    %v872 = vunpack.c.h.b16 %v523
    %v873 = vunpack.c.l.b16 %v524
    %v874 = vunpack.c.h.b16 %v524
    %v875 = vunpack.c.l.b16 %v525
    %v876 = vunpack.c.h.b16 %v525
    %v877 = vunpack.c.l.b16 %v526
    %v878 = vunpack.c.h.b16 %v526
    %v879 = vunpack.c.l.b16 %v527
    %v880 = vunpack.c.h.b16 %v527
    %v881 = vunpack.c.l.b16 %v528
    %v882 = vunpack.c.h.b16 %v528
    %v883 = vunpack.c.l.b16 %v529
    %v884 = vunpack.c.h.b16 %v529
    %v885 = vunpack.c.l.b16 %v530
    %v886 = vunpack.c.h.b16 %v530
    %v887 = vunpack.c.l.b16 %v531
    %v888 = vunpack.c.h.b16 %v531
    %v889 = vunpack.c.l.b16 %v532
    %v890 = vunpack.c.h.b16 %v532
    %v891 = vunpack.c.l.b16 %v533
    %v892 = vunpack.c.h.b16 %v533
    %v893 = vunpack.c.l.b16 %v534
    %v894 = vunpack.c.h.b16 %v534
    %v895 = vunpack.c.l.b16 %v535
    %v896 = vunpack.c.h.b16 %v535
    %v897 = vunpack.c.l.b16 %v536
    %v898 = vunpack.c.h.b16 %v536
    %v899 = vunpack.c.l.b16 %v537
    %v900 = vunpack.c.h.b16 %v537
    %v901 = vunpack.c.l.b16 %v538
    %v902 = vunpack.c.h.b16 %v538
    %v903 = vunpack.c.l.b16 %v539
    %v904 = vunpack.c.h.b16 %v539
    %v905 = vunpack.c.l.b16 %v540
    %v906 = vunpack.c.h.b16 %v540
    %v907 = vunpack.c.l.b16 %v541
    %v908 = vunpack.c.h.b16 %v541
    %v909 = vunpack.c.l.b16 %v542
    %v910 = vunpack.c.h.b16 %v542
    %v911 = vunpack.c.l.b16 %v543
    %v912 = vunpack.c.h.b16 %v543
    %v913 = vunpack.c.l.b16 %v544
    %v914 = vunpack.c.h.b16 %v544
    %v915 = vunpack.c.l.b16 %v545
    %v916 = vunpack.c.h.b16 %v545
    %v917 = vunpack.c.l.b16 %v546
    %v918 = vunpack.c.h.b16 %v546
    %v919 = vunpack.c.l.b16 %v547
    %v920 = vunpack.c.h.b16 %v547
    %v921 = vunpack.c.l.b16 %v548
    %v922 = vunpack.c.h.b16 %v548
    %v923 = vunpack.c.l.b16 %v549
    %v924 = vunpack.c.h.b16 %v549
    %v925 = vunpack.c.l.b16 %v550
    %v926 = vunpack.c.h.b16 %v550
    %v927 = vunpack.c.l.b16 %v551
    %v928 = vunpack.c.h.b16 %v551
    %v929 = vunpack.c.l.b16 %v552
    %v930 = vunpack.c.h.b16 %v552
    %v931 = vunpack.c.l.b16 %v553
    %v932 = vunpack.c.h.b16 %v553
    %v933 = vunpack.c.l.b16 %v554
    %v934 = vunpack.c.h.b16 %v554
    %v935 = vunpack.c.l.b16 %v555
    %v936 = vunpack.c.h.b16 %v555
    %v937 = vunpack.c.l.b16 %v556
    %v938 = vunpack.c.h.b16 %v556
    %v939 = vunpack.c.l.b16 %v557
    %v940 = vunpack.c.h.b16 %v557
    %v941 = vunpack.c.l.b16 %v558
    %v942 = vunpack.c.h.b16 %v558
    %v943 = vpack.c.b16 %v691, %v687
    %v944 = vpack.c.b16 %v692, %v688
    %v945 = vpack.c.b16 %v693, %v689
    %v946 = vpack.c.b16 %v694, %v690
    %v947 = vpack.c.b16 %v699, %v695
    %v948 = vpack.c.b16 %v700, %v696
    %v949 = vpack.c.b16 %v701, %v697
    %v950 = vpack.c.b16 %v702, %v698
    %v951 = vpack.c.b16 %v707, %v703
    %v952 = vpack.c.b16 %v708, %v704
    %v953 = vpack.c.b16 %v709, %v705
    %v954 = vpack.c.b16 %v710, %v706
    %v955 = vpack.c.b16 %v715, %v711
    %v956 = vpack.c.b16 %v716, %v712
    %v957 = vpack.c.b16 %v717, %v713
    %v958 = vpack.c.b16 %v718, %v714
    %v959 = vpack.c.b16 %v723, %v719
    %v960 = vpack.c.b16 %v724, %v720
    %v961 = vpack.c.b16 %v725, %v721
    %v962 = vpack.c.b16 %v726, %v722
    %v963 = vpack.c.b16 %v731, %v727
    %v964 = vpack.c.b16 %v732, %v728
    %v965 = vpack.c.b16 %v733, %v729
    %v966 = vpack.c.b16 %v734, %v730
    %v967 = vpack.c.b16 %v739, %v735
    %v968 = vpack.c.b16 %v740, %v736
    %v969 = vpack.c.b16 %v741, %v737
    %v970 = vpack.c.b16 %v742, %v738
    %v971 = vpack.c.b16 %v747, %v743
    %v972 = vpack.c.b16 %v748, %v744
    %v973 = vpack.c.b16 %v749, %v745
    %v974 = vpack.c.b16 %v750, %v746
    %v975 = vpack.c.b16 %v755, %v751
    %v976 = vpack.c.b16 %v756, %v752
    %v977 = vpack.c.b16 %v757, %v753
    %v978 = vpack.c.b16 %v758, %v754
    %v979 = vpack.c.b16 %v763, %v759
    %v980 = vpack.c.b16 %v764, %v760
    %v981 = vpack.c.b16 %v765, %v761
    %v982 = vpack.c.b16 %v766, %v762
    %v983 = vpack.c.b16 %v771, %v767
    %v984 = vpack.c.b16 %v772, %v768
    %v985 = vpack.c.b16 %v773, %v769
    %v986 = vpack.c.b16 %v774, %v770
    %v987 = vpack.c.b16 %v779, %v775
    %v988 = vpack.c.b16 %v780, %v776
    %v989 = vpack.c.b16 %v781, %v777
    %v990 = vpack.c.b16 %v782, %v778
    %v991 = vpack.c.b16 %v787, %v783
    %v992 = vpack.c.b16 %v788, %v784
    %v993 = vpack.c.b16 %v789, %v785
    %v994 = vpack.c.b16 %v790, %v786
    %v995 = vpack.c.b16 %v795, %v791
    %v996 = vpack.c.b16 %v796, %v792
    %v997 = vpack.c.b16 %v797, %v793
    %v998 = vpack.c.b16 %v798, %v794
    %v999 = vpack.c.b16 %v803, %v799
    %v1000 = vpack.c.b16 %v804, %v800
    %v1001 = vpack.c.b16 %v805, %v801
    %v1002 = vpack.c.b16 %v806, %v802
    %v1003 = vpack.c.b16 %v811, %v807
    %v1004 = vpack.c.b16 %v812, %v808
    %v1005 = vpack.c.b16 %v813, %v809
    %v1006 = vpack.c.b16 %v814, %v810
    %v1007 = vpack.c.b16 %v819, %v815
    %v1008 = vpack.c.b16 %v820, %v816
    %v1009 = vpack.c.b16 %v821, %v817
    %v1010 = vpack.c.b16 %v822, %v818
    %v1011 = vpack.c.b16 %v827, %v823
    %v1012 = vpack.c.b16 %v828, %v824
    %v1013 = vpack.c.b16 %v829, %v825
    %v1014 = vpack.c.b16 %v830, %v826
    %v1015 = vpack.c.b16 %v835, %v831
    %v1016 = vpack.c.b16 %v836, %v832
    %v1017 = vpack.c.b16 %v837, %v833
    %v1018 = vpack.c.b16 %v838, %v834
    %v1019 = vpack.c.b16 %v843, %v839
    %v1020 = vpack.c.b16 %v844, %v840
    %v1021 = vpack.c.b16 %v845, %v841
    %v1022 = vpack.c.b16 %v846, %v842
    %v1023 = vpack.c.b16 %v851, %v847
    %v1024 = vpack.c.b16 %v852, %v848
    %v1025 = vpack.c.b16 %v853, %v849
    %v1026 = vpack.c.b16 %v854, %v850
    %v1027 = vpack.c.b16 %v859, %v855
    %v1028 = vpack.c.b16 %v860, %v856
    %v1029 = vpack.c.b16 %v861, %v857
    %v1030 = vpack.c.b16 %v862, %v858
    %v1031 = vpack.c.b16 %v867, %v863
    %v1032 = vpack.c.b16 %v868, %v864
    %v1033 = vpack.c.b16 %v869, %v865
    %v1034 = vpack.c.b16 %v870, %v866
    %v1035 = vpack.c.b16 %v875, %v871
    %v1036 = vpack.c.b16 %v876, %v872
    %v1037 = vpack.c.b16 %v877, %v873
    %v1038 = vpack.c.b16 %v878, %v874
    %v1039 = vpack.c.b16 %v883, %v879
    %v1040 = vpack.c.b16 %v884, %v880
    %v1041 = vpack.c.b16 %v885, %v881
    %v1042 = vpack.c.b16 %v886, %v882
    %v1043 = vpack.c.b16 %v891, %v887
    %v1044 = vpack.c.b16 %v892, %v888
    %v1045 = vpack.c.b16 %v893, %v889
    %v1046 = vpack.c.b16 %v894, %v890
    %v1047 = vpack.c.b16 %v899, %v895
    %v1048 = vpack.c.b16 %v900, %v896
    %v1049 = vpack.c.b16 %v901, %v897
    %v1050 = vpack.c.b16 %v902, %v898
    %v1051 = vpack.c.b16 %v907, %v903
    %v1052 = vpack.c.b16 %v908, %v904
    %v1053 = vpack.c.b16 %v909, %v905
    %v1054 = vpack.c.b16 %v910, %v906
    %v1055 = vpack.c.b16 %v915, %v911
    %v1056 = vpack.c.b16 %v916, %v912
    %v1057 = vpack.c.b16 %v917, %v913
    %v1058 = vpack.c.b16 %v918, %v914
    %v1059 = vpack.c.b16 %v923, %v919
    %v1060 = vpack.c.b16 %v924, %v920
    %v1061 = vpack.c.b16 %v925, %v921
    %v1062 = vpack.c.b16 %v926, %v922
    %v1063 = vpack.c.b16 %v931, %v927
    %v1064 = vpack.c.b16 %v932, %v928
    %v1065 = vpack.c.b16 %v933, %v929
    %v1066 = vpack.c.b16 %v934, %v930
    %v1067 = vpack.c.b16 %v939, %v935
    %v1068 = vpack.c.b16 %v940, %v936
    %v1069 = vpack.c.b16 %v941, %v937
    %v1070 = vpack.c.b16 %v942, %v938
    %1199 = vmatpush.bf16.msra.mxu0 %v971
    %1200 = vmatpush.bf16.msra.mxu0 %v967
    %1201 = vmatpush.bf16.msra.mxu0 %v963
    %1202 = vmatpush.bf16.msra.mxu0 %v959
    %1203 = vmatpush.bf16.msra.mxu0 %v955
    %1204 = vmatpush.bf16.msra.mxu0 %v951
    %1205 = vmatpush.bf16.msra.mxu0 %v947
    %1206 = vmatpush.bf16.msra.mxu0 %v943
    %1207 = vmatmul.bf16.gmra.mxu0 %v427
    %v1208 = vpop.f32.mrf.mxu0
    %v1209 = vadd.f32 0.0, %v1208
    %v1210 = vpop.f32.mrf.mxu0
    %1211 = vdwg.mxu0
    %1212 = vmatpush.bf16.msra.mxu0 %v1003
    %1213 = vmatpush.bf16.msra.mxu0 %v999
    %1214 = vmatpush.bf16.msra.mxu0 %v995
    %1215 = vmatpush.bf16.msra.mxu0 %v991
    %1216 = vmatpush.bf16.msra.mxu0 %v987
    %1217 = vmatpush.bf16.msra.mxu0 %v983
    %1218 = vmatpush.bf16.msra.mxu0 %v979
    %1219 = vmatpush.bf16.msra.mxu0 %v975
    %1220 = vmatmul.bf16.gmra.mxu0 %v428
    %v1221 = vpop.f32.mrf.mxu0
    %v1222 = vadd.f32 %v1209, %v1221
    %v1223 = vpop.f32.mrf.mxu0
    %1224 = vdwg.mxu0
    %1225 = vmatpush.bf16.msra.mxu0 %v1035
    %1226 = vmatpush.bf16.msra.mxu0 %v1031
    %1227 = vmatpush.bf16.msra.mxu0 %v1027
    %1228 = vmatpush.bf16.msra.mxu0 %v1023
    %1229 = vmatpush.bf16.msra.mxu0 %v1019
    %1230 = vmatpush.bf16.msra.mxu0 %v1015
    %1231 = vmatpush.bf16.msra.mxu0 %v1011
    %1232 = vmatpush.bf16.msra.mxu0 %v1007
    %1233 = vmatmul.bf16.gmra.mxu0 %v429
    %v1234 = vpop.f32.mrf.mxu0
    %v1235 = vadd.f32 %v1222, %v1234
    %v1236 = vpop.f32.mrf.mxu0
    %1237 = vdwg.mxu0
    %1238 = vmatpush.bf16.msra.mxu0 %v1067
    %1239 = vmatpush.bf16.msra.mxu0 %v1063
    %1240 = vmatpush.bf16.msra.mxu0 %v1059
    %1241 = vmatpush.bf16.msra.mxu0 %v1055
    %1242 = vmatpush.bf16.msra.mxu0 %v1051
    %1243 = vmatpush.bf16.msra.mxu0 %v1047
    %1244 = vmatpush.bf16.msra.mxu0 %v1043
    %1245 = vmatpush.bf16.msra.mxu0 %v1039
    %1246 = vmatmul.bf16.gmra.mxu0 %v430
    %v1247 = vpop.f32.mrf.mxu0
    %v1248 = vadd.f32 %v1235, %v1247
    %v1249 = vpop.f32.mrf.mxu0
    %1250 = vdwg.mxu0
    %1251 = vmatpush.bf16.msra.mxu0 %v972
    %1252 = vmatpush.bf16.msra.mxu0 %v968
    %1253 = vmatpush.bf16.msra.mxu0 %v964
    %1254 = vmatpush.bf16.msra.mxu0 %v960
    %1255 = vmatpush.bf16.msra.mxu0 %v956
    %1256 = vmatpush.bf16.msra.mxu0 %v952
    %1257 = vmatpush.bf16.msra.mxu0 %v948
    %1258 = vmatpush.bf16.msra.mxu0 %v944
    %1259 = vmatmul.bf16.gmra.mxu0 %v427
    %v1260 = vpop.f32.mrf.mxu0
    %v1261 = vadd.f32 0.0, %v1260
    %v1262 = vpop.f32.mrf.mxu0
    %1263 = vdwg.mxu0
    %1264 = vmatpush.bf16.msra.mxu0 %v1004
    %1265 = vmatpush.bf16.msra.mxu0 %v1000
    %1266 = vmatpush.bf16.msra.mxu0 %v996
    %1267 = vmatpush.bf16.msra.mxu0 %v992
    %1268 = vmatpush.bf16.msra.mxu0 %v988
    %1269 = vmatpush.bf16.msra.mxu0 %v984
    %1270 = vmatpush.bf16.msra.mxu0 %v980
    %1271 = vmatpush.bf16.msra.mxu0 %v976
    %1272 = vmatmul.bf16.gmra.mxu0 %v428
    %v1273 = vpop.f32.mrf.mxu0
    %v1274 = vadd.f32 %v1261, %v1273
    %v1275 = vpop.f32.mrf.mxu0
    %1276 = vdwg.mxu0
    %1277 = vmatpush.bf16.msra.mxu0 %v1036
    %1278 = vmatpush.bf16.msra.mxu0 %v1032
    %1279 = vmatpush.bf16.msra.mxu0 %v1028
    %1280 = vmatpush.bf16.msra.mxu0 %v1024
    %1281 = vmatpush.bf16.msra.mxu0 %v1020
    %1282 = vmatpush.bf16.msra.mxu0 %v1016
    %1283 = vmatpush.bf16.msra.mxu0 %v1012
    %1284 = vmatpush.bf16.msra.mxu0 %v1008
    %1285 = vmatmul.bf16.gmra.mxu0 %v429
    %v1286 = vpop.f32.mrf.mxu0
    %v1287 = vadd.f32 %v1274, %v1286
    %v1288 = vpop.f32.mrf.mxu0
    %1289 = vdwg.mxu0
    %1290 = vmatpush.bf16.msra.mxu0 %v1068
    %1291 = vmatpush.bf16.msra.mxu0 %v1064
    %1292 = vmatpush.bf16.msra.mxu0 %v1060
    %1293 = vmatpush.bf16.msra.mxu0 %v1056
    %1294 = vmatpush.bf16.msra.mxu0 %v1052
    %1295 = vmatpush.bf16.msra.mxu0 %v1048
    %1296 = vmatpush.bf16.msra.mxu0 %v1044
    %1297 = vmatpush.bf16.msra.mxu0 %v1040
    %1298 = vmatmul.bf16.gmra.mxu0 %v430
    %v1299 = vpop.f32.mrf.mxu0
    %v1300 = vadd.f32 %v1287, %v1299
    %v1301 = vpop.f32.mrf.mxu0
    %1302 = vdwg.mxu0
    %1303 = vmatpush.bf16.msra.mxu0 %v973
    %1304 = vmatpush.bf16.msra.mxu0 %v969
    %1305 = vmatpush.bf16.msra.mxu0 %v965
    %1306 = vmatpush.bf16.msra.mxu0 %v961
    %1307 = vmatpush.bf16.msra.mxu0 %v957
    %1308 = vmatpush.bf16.msra.mxu0 %v953
    %1309 = vmatpush.bf16.msra.mxu0 %v949
    %1310 = vmatpush.bf16.msra.mxu0 %v945
    %1311 = vmatmul.bf16.gmra.mxu0 %v427
    %v1312 = vpop.f32.mrf.mxu0
    %v1313 = vadd.f32 0.0, %v1312
    %v1314 = vpop.f32.mrf.mxu0
    %1315 = vdwg.mxu0
    %1316 = vmatpush.bf16.msra.mxu0 %v1005
    %1317 = vmatpush.bf16.msra.mxu0 %v1001
    %1318 = vmatpush.bf16.msra.mxu0 %v997
    %1319 = vmatpush.bf16.msra.mxu0 %v993
    %1320 = vmatpush.bf16.msra.mxu0 %v989
    %1321 = vmatpush.bf16.msra.mxu0 %v985
    %1322 = vmatpush.bf16.msra.mxu0 %v981
    %1323 = vmatpush.bf16.msra.mxu0 %v977
    %1324 = vmatmul.bf16.gmra.mxu0 %v428
    %v1325 = vpop.f32.mrf.mxu0
    %v1326 = vadd.f32 %v1313, %v1325
    %v1327 = vpop.f32.mrf.mxu0
    %1328 = vdwg.mxu0
    %1329 = vmatpush.bf16.msra.mxu0 %v1037
    %1330 = vmatpush.bf16.msra.mxu0 %v1033
    %1331 = vmatpush.bf16.msra.mxu0 %v1029
    %1332 = vmatpush.bf16.msra.mxu0 %v1025
    %1333 = vmatpush.bf16.msra.mxu0 %v1021
    %1334 = vmatpush.bf16.msra.mxu0 %v1017
    %1335 = vmatpush.bf16.msra.mxu0 %v1013
    %1336 = vmatpush.bf16.msra.mxu0 %v1009
    %1337 = vmatmul.bf16.gmra.mxu0 %v429
    %v1338 = vpop.f32.mrf.mxu0
    %v1339 = vadd.f32 %v1326, %v1338
    %v1340 = vpop.f32.mrf.mxu0
    %1341 = vdwg.mxu0
    %1342 = vmatpush.bf16.msra.mxu0 %v1069
    %1343 = vmatpush.bf16.msra.mxu0 %v1065
    %1344 = vmatpush.bf16.msra.mxu0 %v1061
    %1345 = vmatpush.bf16.msra.mxu0 %v1057
    %1346 = vmatpush.bf16.msra.mxu0 %v1053
    %1347 = vmatpush.bf16.msra.mxu0 %v1049
    %1348 = vmatpush.bf16.msra.mxu0 %v1045
    %1349 = vmatpush.bf16.msra.mxu0 %v1041
    %1350 = vmatmul.bf16.gmra.mxu0 %v430
    %v1351 = vpop.f32.mrf.mxu0
    %v1352 = vadd.f32 %v1339, %v1351
    %v1353 = vpop.f32.mrf.mxu0
    %1354 = vdwg.mxu0
    %1355 = vmatpush.bf16.msra.mxu0 %v974
    %1356 = vmatpush.bf16.msra.mxu0 %v970
    %1357 = vmatpush.bf16.msra.mxu0 %v966
    %1358 = vmatpush.bf16.msra.mxu0 %v962
    %1359 = vmatpush.bf16.msra.mxu0 %v958
    %1360 = vmatpush.bf16.msra.mxu0 %v954
    %1361 = vmatpush.bf16.msra.mxu0 %v950
    %1362 = vmatpush.bf16.msra.mxu0 %v946
    %1363 = vmatmul.bf16.gmra.mxu0 %v427
    %v1364 = vpop.f32.mrf.mxu0
    %v1365 = vadd.f32 0.0, %v1364
    %v1366 = vpop.f32.mrf.mxu0
    %1367 = vdwg.mxu0
    %1368 = vmatpush.bf16.msra.mxu0 %v1006
    %1369 = vmatpush.bf16.msra.mxu0 %v1002
    %1370 = vmatpush.bf16.msra.mxu0 %v998
    %1371 = vmatpush.bf16.msra.mxu0 %v994
    %1372 = vmatpush.bf16.msra.mxu0 %v990
    %1373 = vmatpush.bf16.msra.mxu0 %v986
    %1374 = vmatpush.bf16.msra.mxu0 %v982
    %1375 = vmatpush.bf16.msra.mxu0 %v978
    %1376 = vmatmul.bf16.gmra.mxu0 %v428
    %v1377 = vpop.f32.mrf.mxu0
    %v1378 = vadd.f32 %v1365, %v1377
    %v1379 = vpop.f32.mrf.mxu0
    %1380 = vdwg.mxu0
    %1381 = vmatpush.bf16.msra.mxu0 %v1038
    %1382 = vmatpush.bf16.msra.mxu0 %v1034
    %1383 = vmatpush.bf16.msra.mxu0 %v1030
    %1384 = vmatpush.bf16.msra.mxu0 %v1026
    %1385 = vmatpush.bf16.msra.mxu0 %v1022
    %1386 = vmatpush.bf16.msra.mxu0 %v1018
    %1387 = vmatpush.bf16.msra.mxu0 %v1014
    %1388 = vmatpush.bf16.msra.mxu0 %v1010
    %1389 = vmatmul.bf16.gmra.mxu0 %v429
    %v1390 = vpop.f32.mrf.mxu0
    %v1391 = vadd.f32 %v1378, %v1390
    %v1392 = vpop.f32.mrf.mxu0
    %1393 = vdwg.mxu0
    %1394 = vmatpush.bf16.msra.mxu0 %v1070
    %1395 = vmatpush.bf16.msra.mxu0 %v1066
    %1396 = vmatpush.bf16.msra.mxu0 %v1062
    %1397 = vmatpush.bf16.msra.mxu0 %v1058
    %1398 = vmatpush.bf16.msra.mxu0 %v1054
    %1399 = vmatpush.bf16.msra.mxu0 %v1050
    %1400 = vmatpush.bf16.msra.mxu0 %v1046
    %1401 = vmatpush.bf16.msra.mxu0 %v1042
    %1402 = vmatmul.bf16.gmra.mxu0 %v430
    %v1403 = vpop.f32.mrf.mxu0
    %v1404 = vadd.f32 %v1391, %v1403
    %v1405 = vpop.f32.mrf.mxu0
    %1406 = vdwg.mxu0
    %v1407 = vrot.slane %v1248, 4
    %v1408 = vadd.f32 %v1248, %v1407
    %v1409 = vrot.slane %v1408, 2
    %v1410 = vadd.f32 %v1408, %v1409
    %v1411 = vrot.slane %v1410, 1
    %v1412 = vadd.f32 %v1410, %v1411
    %v1413 = vrot.slane %v1300, 4
    %v1414 = vadd.f32 %v1300, %v1413
    %v1415 = vrot.slane %v1414, 2
    %v1416 = vadd.f32 %v1414, %v1415
    %v1417 = vrot.slane %v1416, 1
    %v1418 = vadd.f32 %v1416, %v1417
    %v1419 = vrot.slane %v1352, 4
    %v1420 = vadd.f32 %v1352, %v1419
    %v1421 = vrot.slane %v1420, 2
    %v1422 = vadd.f32 %v1420, %v1421
    %v1423 = vrot.slane %v1422, 1
    %v1424 = vadd.f32 %v1422, %v1423
    %v1425 = vrot.slane %v1404, 4
    %v1426 = vadd.f32 %v1404, %v1425
    %v1427 = vrot.slane %v1426, 2
    %v1428 = vadd.f32 %v1426, %v1427
    %v1429 = vrot.slane %v1428, 1
    %v1430 = vadd.f32 %v1428, %v1429
    %v1431 = vmul.f32 %v1412, %v271
    %v1432 = vmul.f32 %v1418, %v271
    %v1433 = vmul.f32 %v1424, %v271
    %v1434 = vmul.f32 %v1430, %v271
    %v1435 = vmul.f32 %v1248, %v1248
    %v1436 = vmul.f32 %v1300, %v1300
    %v1437 = vmul.f32 %v1352, %v1352
    %v1438 = vmul.f32 %v1404, %v1404
    %v1439 = vrot.slane %v1435, 4
    %v1440 = vadd.f32 %v1435, %v1439
    %v1441 = vrot.slane %v1440, 2
    %v1442 = vadd.f32 %v1440, %v1441
    %v1443 = vrot.slane %v1442, 1
    %v1444 = vadd.f32 %v1442, %v1443
    %v1445 = vrot.slane %v1436, 4
    %v1446 = vadd.f32 %v1436, %v1445
    %v1447 = vrot.slane %v1446, 2
    %v1448 = vadd.f32 %v1446, %v1447
    %v1449 = vrot.slane %v1448, 1
    %v1450 = vadd.f32 %v1448, %v1449
    %v1451 = vrot.slane %v1437, 4
    %v1452 = vadd.f32 %v1437, %v1451
    %v1453 = vrot.slane %v1452, 2
    %v1454 = vadd.f32 %v1452, %v1453
    %v1455 = vrot.slane %v1454, 1
    %v1456 = vadd.f32 %v1454, %v1455
    %v1457 = vrot.slane %v1438, 4
    %v1458 = vadd.f32 %v1438, %v1457
    %v1459 = vrot.slane %v1458, 2
    %v1460 = vadd.f32 %v1458, %v1459
    %v1461 = vrot.slane %v1460, 1
    %v1462 = vadd.f32 %v1460, %v1461
    %v1463 = vmul.f32 %v1444, %v271
    %v1464 = vmul.f32 %v1450, %v271
    %v1465 = vmul.f32 %v1456, %v271
    %v1466 = vmul.f32 %v1462, %v271
    %v1467 = vmul.f32 %v1431, %v1431
    %v1468 = vmul.f32 %v1432, %v1432
    %v1469 = vmul.f32 %v1433, %v1433
    %v1470 = vmul.f32 %v1434, %v1434
    %v1471 = vsub.f32 %v1463, %v1467
    %v1472 = vsub.f32 %v1464, %v1468
    %v1473 = vsub.f32 %v1465, %v1469
    %v1474 = vsub.f32 %v1466, %v1470
    %v1475 = vmax.f32 %v1471, 0.0
    %v1476 = vmax.f32 %v1472, 0.0
    %v1477 = vmax.f32 %v1473, 0.0
    %v1478 = vmax.f32 %v1474, 0.0
    %v1479 = vld [vmem:[%s5] sm:$0xf]
    %v1480 = vadd.f32 %v1475, 1e-05
    %v1481 = vadd.f32 %v1476, 1e-05
    %v1482 = vadd.f32 %v1477, 1e-05
    %v1483 = vadd.f32 %v1478, 1e-05
    %v1484 = vrsqrt.pop %v1480
    %v1485 = vmul.f32 %v1484, %v1480
    %v1486 = vmul.f32 %v1485, %v1484
    %v1487 = vmul.f32 0.5, %v1486
    %v1488 = vsub.f32 1.5, %v1487
    %v1489 = vmul.f32 %v1484, %v1488
    %vm1490 = vweird.f32 %v1480
    %vm1491 = vweird.f32 %v1484
    %vm1492 = vmor %vm1490, %vm1491
    %v1493 = vsel %vm1492, %v1484, %v1489
    %v1494 = vrsqrt.pop %v1481
    %v1495 = vmul.f32 %v1494, %v1481
    %v1496 = vmul.f32 %v1495, %v1494
    %v1497 = vmul.f32 0.5, %v1496
    %v1498 = vsub.f32 1.5, %v1497
    %v1499 = vmul.f32 %v1494, %v1498
    %vm1500 = vweird.f32 %v1481
    %vm1501 = vweird.f32 %v1494
    %vm1502 = vmor %vm1500, %vm1501
    %v1503 = vsel %vm1502, %v1494, %v1499
    %v1504 = vrsqrt.pop %v1482
    %v1505 = vmul.f32 %v1504, %v1482
    %v1506 = vmul.f32 %v1505, %v1504
    %v1507 = vmul.f32 0.5, %v1506
    %v1508 = vsub.f32 1.5, %v1507
    %v1509 = vmul.f32 %v1504, %v1508
    %vm1510 = vweird.f32 %v1482
    %vm1511 = vweird.f32 %v1504
    %vm1512 = vmor %vm1510, %vm1511
    %v1513 = vsel %vm1512, %v1504, %v1509
    %v1514 = vrsqrt.pop %v1483
    %v1515 = vmul.f32 %v1514, %v1483
    %v1516 = vmul.f32 %v1515, %v1514
    %v1517 = vmul.f32 0.5, %v1516
    %v1518 = vsub.f32 1.5, %v1517
    %v1519 = vmul.f32 %v1514, %v1518
    %vm1520 = vweird.f32 %v1483
    %vm1521 = vweird.f32 %v1514
    %vm1522 = vmor %vm1520, %vm1521
    %v1523 = vsel %vm1522, %v1514, %v1519
    %v1528 = vrot.slane %v1503, 7
    %v1529 = vrot.slane %v1513, 6
    %v1530 = vrot.slane %v1523, 5
    %v1531 = vsel %vm372, %v1493, %v1528
    %v1532 = vsel %vm374, %v1529, %v1530
    %v1533 = vsel %vm376, %v1531, %v1532
    %v1535 = vmul.f32 %v1479, %v1533
    %v1536 = vld [vmem:[#allocation11] sm:$0xf]
    %v1538 = vperm.slane %v1535, 0
    %v1539 = vperm.slane %v1535, 1
    %v1540 = vperm.slane %v1535, 2
    %v1541 = vperm.slane %v1535, 3
    %v1546 = vmul.f32 %v1431, %v1538
    %v1547 = vmul.f32 %v1432, %v1539
    %v1548 = vmul.f32 %v1433, %v1540
    %v1549 = vmul.f32 %v1434, %v1541
    %v1554 = vrot.slane %v1547, 7
    %v1555 = vrot.slane %v1548, 6
    %v1556 = vrot.slane %v1549, 5
    %v1557 = vsel %vm372, %v1546, %v1554
    %v1558 = vsel %vm374, %v1555, %v1556
    %v1559 = vsel %vm376, %v1557, %v1558
    %v1561 = vsub.f32 %v1536, %v1559
    %v1562 = vmul.f32 %v1248, %v1538
    %v1563 = vmul.f32 %v1300, %v1539
    %v1564 = vmul.f32 %v1352, %v1540
    %v1565 = vmul.f32 %v1404, %v1541
    %v1567 = vperm.slane %v1561, 0
    %v1568 = vperm.slane %v1561, 1
    %v1569 = vperm.slane %v1561, 2
    %v1570 = vperm.slane %v1561, 3
    %v1575 = vadd.f32 %v1562, %v1567
    %v1576 = vadd.f32 %v1563, %v1568
    %v1577 = vadd.f32 %v1564, %v1569
    %v1578 = vadd.f32 %v1565, %v1570
    %v1579 = vmax.f32 %v1575, 0.0
    %v1580 = vmax.f32 %v1576, 0.0
    %v1581 = vmax.f32 %v1577, 0.0
    %v1582 = vmax.f32 %v1578, 0.0
    %v1583 = vpack.c.bf16 %v1579, %v1579
    %v1584 = vpack.c.bf16 %v1580, %v1580
    %v1585 = vpack.c.bf16 %v1581, %v1581
    %v1586 = vpack.c.bf16 %v1582, %v1582
    %v1587 = vld [vmem:[#allocation13] sm:$0xf]
    %v1588 = vld [vmem:[#allocation13 + $0x4] sm:$0xf]
    %v1589 = vld [vmem:[#allocation13 + $0x8] sm:$0xf]
    %v1590 = vld [vmem:[#allocation13 + $0xc] sm:$0xf]
    %v1591 = vld [vmem:[#allocation13 + $0x10] sm:$0xf]
    %v1592 = vld [vmem:[#allocation13 + $0x14] sm:$0xf]
    %v1593 = vld [vmem:[#allocation13 + $0x18] sm:$0xf]
    %v1594 = vld [vmem:[#allocation13 + $0x1c] sm:$0xf]
    %v1595 = vld [vmem:[#allocation13 + $0x20] sm:$0xf]
    %v1596 = vld [vmem:[#allocation13 + $0x24] sm:$0xf]
    %v1597 = vld [vmem:[#allocation13 + $0x28] sm:$0xf]
    %v1598 = vld [vmem:[#allocation13 + $0x2c] sm:$0xf]
    %v1599 = vld [vmem:[#allocation13 + $0x30] sm:$0xf]
    %v1600 = vld [vmem:[#allocation13 + $0x34] sm:$0xf]
    %v1601 = vld [vmem:[#allocation13 + $0x38] sm:$0xf]
    %v1602 = vld [vmem:[#allocation13 + $0x3c] sm:$0xf]
    %v1603 = vld [vmem:[#allocation13 + $0x40] sm:$0xf]
    %v1604 = vld [vmem:[#allocation13 + $0x44] sm:$0xf]
    %v1605 = vld [vmem:[#allocation13 + $0x48] sm:$0xf]
    %v1606 = vld [vmem:[#allocation13 + $0x4c] sm:$0xf]
    %v1607 = vld [vmem:[#allocation13 + $0x50] sm:$0xf]
    %v1608 = vld [vmem:[#allocation13 + $0x54] sm:$0xf]
    %v1609 = vld [vmem:[#allocation13 + $0x58] sm:$0xf]
    %v1610 = vld [vmem:[#allocation13 + $0x5c] sm:$0xf]
    %v1611 = vld [vmem:[#allocation13 + $0x60] sm:$0xf]
    %v1612 = vld [vmem:[#allocation13 + $0x64] sm:$0xf]
    %v1613 = vld [vmem:[#allocation13 + $0x68] sm:$0xf]
    %v1614 = vld [vmem:[#allocation13 + $0x6c] sm:$0xf]
    %v1615 = vld [vmem:[#allocation13 + $0x70] sm:$0xf]
    %v1616 = vld [vmem:[#allocation13 + $0x74] sm:$0xf]
    %v1617 = vld [vmem:[#allocation13 + $0x78] sm:$0xf]
    %v1618 = vld [vmem:[#allocation13 + $0x7c] sm:$0xf]
    %v1619 = vld [vmem:[#allocation13 + $0x80] sm:$0xf]
    %v1620 = vld [vmem:[#allocation13 + $0x84] sm:$0xf]
    %v1621 = vld [vmem:[#allocation13 + $0x88] sm:$0xf]
    %v1622 = vld [vmem:[#allocation13 + $0x8c] sm:$0xf]
    %v1623 = vld [vmem:[#allocation13 + $0x90] sm:$0xf]
    %v1624 = vld [vmem:[#allocation13 + $0x94] sm:$0xf]
    %v1625 = vld [vmem:[#allocation13 + $0x98] sm:$0xf]
    %v1626 = vld [vmem:[#allocation13 + $0x9c] sm:$0xf]
    %v1627 = vld [vmem:[#allocation13 + $0xa0] sm:$0xf]
    %v1628 = vld [vmem:[#allocation13 + $0xa4] sm:$0xf]
    %v1629 = vld [vmem:[#allocation13 + $0xa8] sm:$0xf]
    %v1630 = vld [vmem:[#allocation13 + $0xac] sm:$0xf]
    %v1631 = vld [vmem:[#allocation13 + $0xb0] sm:$0xf]
    %v1632 = vld [vmem:[#allocation13 + $0xb4] sm:$0xf]
    %v1633 = vld [vmem:[#allocation13 + $0xb8] sm:$0xf]
    %v1634 = vld [vmem:[#allocation13 + $0xbc] sm:$0xf]
    %v1635 = vld [vmem:[#allocation13 + $0xc0] sm:$0xf]
    %v1636 = vld [vmem:[#allocation13 + $0xc4] sm:$0xf]
    %v1637 = vld [vmem:[#allocation13 + $0xc8] sm:$0xf]
    %v1638 = vld [vmem:[#allocation13 + $0xcc] sm:$0xf]
    %v1639 = vld [vmem:[#allocation13 + $0xd0] sm:$0xf]
    %v1640 = vld [vmem:[#allocation13 + $0xd4] sm:$0xf]
    %v1641 = vld [vmem:[#allocation13 + $0xd8] sm:$0xf]
    %v1642 = vld [vmem:[#allocation13 + $0xdc] sm:$0xf]
    %v1643 = vld [vmem:[#allocation13 + $0xe0] sm:$0xf]
    %v1644 = vld [vmem:[#allocation13 + $0xe4] sm:$0xf]
    %v1645 = vld [vmem:[#allocation13 + $0xe8] sm:$0xf]
    %v1646 = vld [vmem:[#allocation13 + $0xec] sm:$0xf]
    %v1647 = vld [vmem:[#allocation13 + $0xf0] sm:$0xf]
    %v1648 = vld [vmem:[#allocation13 + $0xf4] sm:$0xf]
    %v1649 = vld [vmem:[#allocation13 + $0xf8] sm:$0xf]
    %v1650 = vld [vmem:[#allocation13 + $0xfc] sm:$0xf]
    %v1651 = vld [vmem:[%s8] sm:$0x1]
    %v1653 = vperm.slane %v1651, 0
    %v1719 = vunpack.c.l.b16 %v1587
    %v1720 = vunpack.c.l.b16 %v1588
    %v1721 = vunpack.c.l.b16 %v1589
    %v1722 = vunpack.c.l.b16 %v1590
    %v1723 = vunpack.c.l.b16 %v1591
    %v1724 = vunpack.c.l.b16 %v1592
    %v1725 = vunpack.c.l.b16 %v1593
    %v1726 = vunpack.c.l.b16 %v1594
    %v1727 = vunpack.c.l.b16 %v1595
    %v1728 = vunpack.c.l.b16 %v1596
    %v1729 = vunpack.c.l.b16 %v1597
    %v1730 = vunpack.c.l.b16 %v1598
    %v1731 = vunpack.c.l.b16 %v1599
    %v1732 = vunpack.c.l.b16 %v1600
    %v1733 = vunpack.c.l.b16 %v1601
    %v1734 = vunpack.c.l.b16 %v1602
    %v1735 = vunpack.c.l.b16 %v1603
    %v1736 = vunpack.c.l.b16 %v1604
    %v1737 = vunpack.c.l.b16 %v1605
    %v1738 = vunpack.c.l.b16 %v1606
    %v1739 = vunpack.c.l.b16 %v1607
    %v1740 = vunpack.c.l.b16 %v1608
    %v1741 = vunpack.c.l.b16 %v1609
    %v1742 = vunpack.c.l.b16 %v1610
    %v1743 = vunpack.c.l.b16 %v1611
    %v1744 = vunpack.c.l.b16 %v1612
    %v1745 = vunpack.c.l.b16 %v1613
    %v1746 = vunpack.c.l.b16 %v1614
    %v1747 = vunpack.c.l.b16 %v1615
    %v1748 = vunpack.c.l.b16 %v1616
    %v1749 = vunpack.c.l.b16 %v1617
    %v1750 = vunpack.c.l.b16 %v1618
    %v1751 = vunpack.c.l.b16 %v1619
    %v1752 = vunpack.c.l.b16 %v1620
    %v1753 = vunpack.c.l.b16 %v1621
    %v1754 = vunpack.c.l.b16 %v1622
    %v1755 = vunpack.c.l.b16 %v1623
    %v1756 = vunpack.c.l.b16 %v1624
    %v1757 = vunpack.c.l.b16 %v1625
    %v1758 = vunpack.c.l.b16 %v1626
    %v1759 = vunpack.c.l.b16 %v1627
    %v1760 = vunpack.c.l.b16 %v1628
    %v1761 = vunpack.c.l.b16 %v1629
    %v1762 = vunpack.c.l.b16 %v1630
    %v1763 = vunpack.c.l.b16 %v1631
    %v1764 = vunpack.c.l.b16 %v1632
    %v1765 = vunpack.c.l.b16 %v1633
    %v1766 = vunpack.c.l.b16 %v1634
    %v1767 = vunpack.c.l.b16 %v1635
    %v1768 = vunpack.c.l.b16 %v1636
    %v1769 = vunpack.c.l.b16 %v1637
    %v1770 = vunpack.c.l.b16 %v1638
    %v1771 = vunpack.c.l.b16 %v1639
    %v1772 = vunpack.c.l.b16 %v1640
    %v1773 = vunpack.c.l.b16 %v1641
    %v1774 = vunpack.c.l.b16 %v1642
    %v1775 = vunpack.c.l.b16 %v1643
    %v1776 = vunpack.c.l.b16 %v1644
    %v1777 = vunpack.c.l.b16 %v1645
    %v1778 = vunpack.c.l.b16 %v1646
    %v1779 = vunpack.c.l.b16 %v1647
    %v1780 = vunpack.c.l.b16 %v1648
    %v1781 = vunpack.c.l.b16 %v1649
    %v1782 = vunpack.c.l.b16 %v1650
    %v1783 = vpack.c.b16 %v1720, %v1719
    %v1784 = vpack.c.b16 %v1722, %v1721
    %v1785 = vpack.c.b16 %v1724, %v1723
    %v1786 = vpack.c.b16 %v1726, %v1725
    %v1787 = vpack.c.b16 %v1728, %v1727
    %v1788 = vpack.c.b16 %v1730, %v1729
    %v1789 = vpack.c.b16 %v1732, %v1731
    %v1790 = vpack.c.b16 %v1734, %v1733
    %v1791 = vpack.c.b16 %v1736, %v1735
    %v1792 = vpack.c.b16 %v1738, %v1737
    %v1793 = vpack.c.b16 %v1740, %v1739
    %v1794 = vpack.c.b16 %v1742, %v1741
    %v1795 = vpack.c.b16 %v1744, %v1743
    %v1796 = vpack.c.b16 %v1746, %v1745
    %v1797 = vpack.c.b16 %v1748, %v1747
    %v1798 = vpack.c.b16 %v1750, %v1749
    %v1799 = vpack.c.b16 %v1752, %v1751
    %v1800 = vpack.c.b16 %v1754, %v1753
    %v1801 = vpack.c.b16 %v1756, %v1755
    %v1802 = vpack.c.b16 %v1758, %v1757
    %v1803 = vpack.c.b16 %v1760, %v1759
    %v1804 = vpack.c.b16 %v1762, %v1761
    %v1805 = vpack.c.b16 %v1764, %v1763
    %v1806 = vpack.c.b16 %v1766, %v1765
    %v1807 = vpack.c.b16 %v1768, %v1767
    %v1808 = vpack.c.b16 %v1770, %v1769
    %v1809 = vpack.c.b16 %v1772, %v1771
    %v1810 = vpack.c.b16 %v1774, %v1773
    %v1811 = vpack.c.b16 %v1776, %v1775
    %v1812 = vpack.c.b16 %v1778, %v1777
    %v1813 = vpack.c.b16 %v1780, %v1779
    %v1814 = vpack.c.b16 %v1782, %v1781
    %1847 = vmatpush.bf16.msra.mxu0 %v1790
    %1848 = vmatpush.bf16.msra.mxu0 %v1789
    %1849 = vmatpush.bf16.msra.mxu0 %v1788
    %1850 = vmatpush.bf16.msra.mxu0 %v1787
    %1851 = vmatpush.bf16.msra.mxu0 %v1786
    %1852 = vmatpush.bf16.msra.mxu0 %v1785
    %1853 = vmatpush.bf16.msra.mxu0 %v1784
    %1854 = vmatpush.bf16.msra.mxu0 %v1783
    %1855 = vmatmul.bf16.gmra.mxu0 %v1583
    %v1856 = vpop.f32.mrf.mxu0
    %v1857 = vadd.f32 %v1653, %v1856
    %v1858 = vpop.f32.mrf.mxu0
    %1859 = vdwg.mxu0
    %1860 = vmatpush.bf16.msra.mxu0 %v1798
    %1861 = vmatpush.bf16.msra.mxu0 %v1797
    %1862 = vmatpush.bf16.msra.mxu0 %v1796
    %1863 = vmatpush.bf16.msra.mxu0 %v1795
    %1864 = vmatpush.bf16.msra.mxu0 %v1794
    %1865 = vmatpush.bf16.msra.mxu0 %v1793
    %1866 = vmatpush.bf16.msra.mxu0 %v1792
    %1867 = vmatpush.bf16.msra.mxu0 %v1791
    %1868 = vmatmul.bf16.gmra.mxu0 %v1584
    %v1869 = vpop.f32.mrf.mxu0
    %v1870 = vadd.f32 %v1857, %v1869
    %v1871 = vpop.f32.mrf.mxu0
    %1872 = vdwg.mxu0
    %1873 = vmatpush.bf16.msra.mxu0 %v1806
    %1874 = vmatpush.bf16.msra.mxu0 %v1805
    %1875 = vmatpush.bf16.msra.mxu0 %v1804
    %1876 = vmatpush.bf16.msra.mxu0 %v1803
    %1877 = vmatpush.bf16.msra.mxu0 %v1802
    %1878 = vmatpush.bf16.msra.mxu0 %v1801
    %1879 = vmatpush.bf16.msra.mxu0 %v1800
    %1880 = vmatpush.bf16.msra.mxu0 %v1799
    %1881 = vmatmul.bf16.gmra.mxu0 %v1585
    %v1882 = vpop.f32.mrf.mxu0
    %v1883 = vadd.f32 %v1870, %v1882
    %v1884 = vpop.f32.mrf.mxu0
    %1885 = vdwg.mxu0
    %1886 = vmatpush.bf16.msra.mxu0 %v1814
    %1887 = vmatpush.bf16.msra.mxu0 %v1813
    %1888 = vmatpush.bf16.msra.mxu0 %v1812
    %1889 = vmatpush.bf16.msra.mxu0 %v1811
    %1890 = vmatpush.bf16.msra.mxu0 %v1810
    %1891 = vmatpush.bf16.msra.mxu0 %v1809
    %1892 = vmatpush.bf16.msra.mxu0 %v1808
    %1893 = vmatpush.bf16.msra.mxu0 %v1807
    %1894 = vmatmul.bf16.gmra.mxu0 %v1586
    %v1895 = vpop.f32.mrf.mxu0
    %v1896 = vadd.f32 %v1883, %v1895
    %v1897 = vpop.f32.mrf.mxu0
    %1898 = vdwg.mxu0
    %v1899 = vmul.f32 %v1896, %v1896
    %1900 = vadd.xlane.f32.xlu0 %v1899
    %v1901 = vpop.xlane.xlu0 %1900
    %v1902 = vrsqrt.pop %v1901
    %v1903 = vmul.f32 %v1902, %v1901
    %v1904 = vmul.f32 %v1903, %v1902
    %v1905 = vmul.f32 0.5, %v1904
    %v1906 = vsub.f32 1.5, %v1905
    %v1907 = vmul.f32 %v1902, %v1906
    %vm1908 = vweird.f32 %v1901
    %vm1909 = vweird.f32 %v1902
    %vm1910 = vmor %vm1908, %vm1909
    %v1911 = vsel %vm1910, %v1902, %v1907
    %v1912 = vmul.f32 %v1896, %v1911
    %1913 = vst [vmem:[#allocation14] sm:$0xff] %v1912
    // Predicated region
    $region66: #{tpu_custom_call.1} parent=1 // pred_check
      _
    $region67: #{tpu_custom_call.1} parent=1 // pred_check_branch
      %1915 = sbr.rel (0) target = $region69
    $region68: #{tpu_custom_call.1} parent=1 // pred_region
      %1917 = vsyncadd [#allocation4], 0
      %s1919 = sshll.u32 [#allocation14], 4
      %s1920 = int_to_ptr.vmem [resolvable:$true] %s1919
      %s1921 = sshll.u32 %s9, 4
      %s1922 = int_to_ptr.hbm [resolvable:$true] %s1921
      %1924 = dma.vmem_to_hbm [thread:$0]  %s1920, 128, %s1922, [#allocation4]
    $region69: #{tpu_custom_call.1} parent=1 // pred_fallthru
      _
    // Predicated region
    $region70: #{tpu_custom_call.1} parent=1 // pred_check
      _
    $region71: #{tpu_custom_call.1} parent=1 // pred_check_branch
      %1926 = sbr.rel (0) target = $region73
    $region72: #{tpu_custom_call.1} parent=1 // pred_region
      %1928 = dma.done [#allocation4], 128
    $region73: #{tpu_custom_call.1} parent=1 // pred_fallthru
      _
    %1929 = vsyncpa [#allocation3], 1
    %1930 = vsyncpa [#allocation6], 1
    %1931 = vsyncpa [#allocation9], 1
    %1932 = vsyncpa [#allocation12], 1
    %1933 = vsyncpa [#allocation4], 1

</llo_original>
